<compile_context>
chip_gen: v7x
topology: tpu7x:2x2x1
jax: 0.10.0
libtpu: 0.0.40
codegen_flags: <defaults>
</compile_context>

<pallas_src>
import functools
import inspect
import warnings

import jax
import jax.numpy as jnp
from jax.experimental import pallas as pl
from jax.experimental.pallas import tpu as pltpu


def _round_up(n, m):
    return (n + m - 1) // m * m


def _pick_time_tile(L, pad, target=1024):
    """Largest multiple-of-8 divisor of L that is <= target and >= 2*pad; else L."""
    if L <= target:
        return L
    lo = max(8, _round_up(2 * pad, 8))
    t = (min(L, target) // 8) * 8
    while t >= lo:
        if L % t == 0:
            return t
        t -= 8
    return L


def _pick_halo(tL, pad):
    """Smallest multiple-of-8 divisor of tL that covers 2*pad history rows."""
    need = 2 * pad
    h = 8
    while h <= tL:
        if tL % h == 0 and h >= need:
            return h
        h += 8
    return tL


# `pipeline_mode=pl.Buffered(1)` (single-buffered constant weights) is only used when
# this JAX version supports it; otherwise we fall back to default double-buffering.
try:
    _HAS_PIPELINE_MODE = hasattr(pl, "Buffered") and (
        "pipeline_mode" in inspect.signature(pl.BlockSpec).parameters)
except (ValueError, TypeError):  # pragma: no cover - exotic signature introspection
    _HAS_PIPELINE_MODE = False


def _temporal_block_kernel(*refs, K, dilation, pad, tL, hist, has_halo,
                           has_downsample, conv_dtype):
    it = iter(refs)
    x_ref = next(it)
    halo_ref = next(it) if has_halo else None
    w1_ref = next(it)
    b1_ref = next(it)
    w2_ref = next(it)
    b2_ref = next(it)
    wd_ref = next(it) if has_downsample else None
    bd_ref = next(it) if has_downsample else None
    out_ref = next(it)

    t = pl.program_id(1)
    d = dilation
    E = tL + pad                                   # conv1 output rows needed by conv2

    x_cur = x_ref[...]                             # (tL, Cinp), io dtype (residual path)
    x_cur_c = x_cur.astype(conv_dtype)             # MXU operand

    # Causal history window [t*tL - hist, t*tL); rows before the sequence start are 0.
    if hist > 0:
        if has_halo:
            # t == 0  ->  the whole halo block is before the sequence start: mask it.
            halo = jnp.where(t > 0, halo_ref[...], 0).astype(conv_dtype)
        else:
            halo = jnp.zeros((hist, x_cur.shape[1]), conv_dtype)
        xwin = jnp.concatenate([halo, x_cur_c], axis=0)        # (hist + tL, Cinp)
    else:
        xwin = x_cur_c
    off0 = hist - 2 * pad                          # start of conv1's window inside xwin

    # ---- conv1: K per-tap MXU matmuls accumulated in f32 (no lane-concat buffer) ----
    out1 = b1_ref[...]                                          # (1, Coutp) f32, broadcasts
    for k in range(K):
        out1 = out1 + jnp.dot(xwin[off0 + k * d: off0 + k * d + E, :], w1_ref[k],
                              preferred_element_type=jnp.float32)
    out1 = jnp.maximum(out1, 0.0)                  # ReLU1 (dropout1 == identity, eval)
    # conv2's causal zero padding: conv1 outputs at global time < 0 must be exactly 0.
    g = t * tL - pad + jax.lax.broadcasted_iota(jnp.int32, (E, 1), 0)
    out1 = jnp.where(g >= 0, out1, 0.0).astype(conv_dtype)

    # ---- conv2: same per-tap form, straight from registers (no VMEM round trip) ----
    out2 = b2_ref[...]
    for k in range(K):
        out2 = out2 + jnp.dot(out1[k * d: k * d + tL, :], w2_ref[k],
                              preferred_element_type=jnp.float32)
    out2 = jnp.maximum(out2, 0.0)                  # ReLU2 (dropout2 == identity, eval)

    # ---- residual + final ReLU (ReLU2 above forbids fusing the 1x1 into conv2) ----
    if has_downsample:
        res = jnp.dot(x_cur_c, wd_ref[...],
                      preferred_element_type=jnp.float32) + bd_ref[...]
    else:
        res = x_cur.astype(jnp.float32)
    out_ref[...] = jnp.maximum(out2 + res, 0.0).astype(out_ref.dtype)


def temporal_block_nlc(x, w1, b1, w2, b2, wd=None, bd=None, *,
                       kernel_size, stride, dilation, padding,
                       time_tile=None, time_tile_target=1024,
                       conv_dtype=jnp.bfloat16, out_dtype=None,
                       keep_padded_channels=False, single_buffer_weights=True):
    """Channels-last TemporalBlock.

    x:  (B, L, Cx) with Cx == Cin, or Cx a multiple of 128 >= Cin whose trailing
        (Cx - Cin) channels are zero (e.g. the padded output of a previous block).
    w1: (Cout, Cin, K); w2: (Cout, Cout, K); wd: (Cout, Cin, 1) or None.
    Returns (B, L, Cout), or (B, L, round_up(Cout, 128)) lane-padded with exact zeros
    when keep_padded_channels=True (the fast path for chaining stacked blocks: no
    transpose / pad / slice HBM passes between blocks).
    """
    assert stride == 1, "TemporalBlock residual add requires stride == 1"
    K = kernel_size
    pad = padding
    assert pad == (K - 1) * dilation, "causal TCN padding expected"

    B, L, Cx = x.shape
    Cout, Cin, Kw = w1.shape
    assert Kw == K
    has_ds = wd is not None
    if not has_ds:
        assert Cin == Cout, "identity residual requires Cin == Cout"

    if Cx == Cin:
        Cinp = _round_up(Cin, 128)                 # lane-dense channel padding
        if Cinp != Cx:
            x = jnp.pad(x, ((0, 0), (0, 0), (0, Cinp - Cx)))    # once per stack entry
    else:
        assert Cx % 128 == 0 and Cx >= Cin, \
            "padded channels-last input must be a multiple of 128 wide"
        Cinp = Cx
    Coutp = _round_up(Cout, 128)
    if not has_ds:
        assert Cinp == Coutp, "identity residual requires matching padded channel widths"
    if out_dtype is None:
        out_dtype = x.dtype

    # ---- time tiling ----
    if time_tile is None:
        tL = _pick_time_tile(L, pad, target=time_tile_target)
    else:
        tL = time_tile
        assert L % tL == 0
        if tL != L:
            assert tL % 8 == 0 and tL >= 2 * pad, \
                "time_tile must be a multiple of 8 and >= 2*padding"
    nT = L // tL
    need_halo = (nT > 1) and (pad > 0)
    if need_halo:
        H = _pick_halo(tL, pad)                    # halo rows (multiple of 8, divides tL)
        hist = H
        if H == tL:
            warnings.warn("TemporalBlock halo spans the whole previous tile; input HBM "
                          "traffic roughly doubles. Pick a time_tile with a "
                          "multiple-of-8 divisor >= 2*padding.")
    else:
        H = 0
        hist = _round_up(2 * pad, 8) if pad > 0 else 0          # in-kernel zero history

    # ---- weights / bias prep (tiny, host-side) ----
    def prep_w(w, cin_p):
        # (Cout, Cin_like, K) -> (K, cin_p, Coutp), zero-padded, MXU dtype
        wt = jnp.transpose(w, (2, 1, 0))                        # (K, Cin_like, Cout)
        wt = jnp.pad(wt, ((0, 0), (0, cin_p - w.shape[1]), (0, Coutp - Cout)))
        return wt.astype(conv_dtype)

    w1c = prep_w(w1, Cinp)                                      # (K, Cinp, Coutp)
    w2c = prep_w(w2, Coutp)                                     # (K, Coutp, Coutp)
    b1r = jnp.pad(b1, (0, Coutp - Cout)).reshape(1, Coutp).astype(jnp.float32)
    b2r = jnp.pad(b2, (0, Coutp - Cout)).reshape(1, Coutp).astype(jnp.float32)
    if has_ds:
        wdc = jnp.pad(jnp.transpose(wd[:, :, 0], (1, 0)),
                      ((0, Cinp - Cin), (0, Coutp - Cout))).astype(conv_dtype)
        bdr = jnp.pad(bd, (0, Coutp - Cout)).reshape(1, Coutp).astype(jnp.float32)

    kernel = functools.partial(
        _temporal_block_kernel, K=K, dilation=dilation, pad=pad, tL=tL, hist=hist,
        has_halo=need_halo, has_downsample=has_ds, conv_dtype=conv_dtype)

    in_bytes = jnp.dtype(x.dtype).itemsize
    ob = jnp.dtype(out_dtype).itemsize
    cb = jnp.dtype(conv_dtype).itemsize

    def run(single_buffer):
        def const_spec(shape):
            idx = lambda b, t: (0,) * len(shape)
            if single_buffer:
                return pl.BlockSpec(shape, idx, pipeline_mode=pl.Buffered(1))
            return pl.BlockSpec(shape, idx)

        in_specs = [pl.BlockSpec((None, tL, Cinp), lambda b, t: (b, t, 0))]
        args = [x]
        if need_halo:
            ratio = tL // H
            in_specs.append(pl.BlockSpec(
                (None, H, Cinp),
                lambda b, t: (b, jnp.maximum(t * ratio - 1, 0), 0)))  # prev rows; masked t==0
            args.append(x)
        in_specs += [const_spec((K, Cinp, Coutp)), const_spec((1, Coutp)),
                     const_spec((K, Coutp, Coutp)), const_spec((1, Coutp))]
        args += [w1c, b1r, w2c, b2r]
        if has_ds:
            in_specs += [const_spec((Cinp, Coutp)), const_spec((1, Coutp))]
            args += [wdc, bdr]

        # VMEM budget: double-buffered activations + (single|double)-buffered constants
        # + headroom for in-register intermediates; clamp to [32 MiB, 64 MiB] so the
        # request is also valid on v7x's 64 MiB physical VMEM.
        wbuf = 1 if single_buffer else 2
        est = (2 * tL * Cinp * in_bytes + 2 * H * Cinp * in_bytes
               + 2 * tL * Coutp * ob
               + wbuf * cb * (K * Cinp * Coutp + K * Coutp * Coutp
                              + (Cinp * Coutp if has_ds else 0))
               + 8 * (tL + hist) * max(Cinp, Coutp))
        vmem_limit = int(min(64 * 1024 * 1024, max(32 * 1024 * 1024, 2 * est)))

        return pl.pallas_call(
            kernel,
            out_shape=jax.ShapeDtypeStruct((B, L, Coutp), out_dtype),
            grid=(B, nT),
            in_specs=in_specs,
            out_specs=pl.BlockSpec((None, tL, Coutp), lambda b, t: (b, t, 0)),
            compiler_params=pltpu.CompilerParams(
                dimension_semantics=("parallel", "parallel"),   # megacore-friendly on v7x
                vmem_limit_bytes=vmem_limit),
        )(*args)

    if single_buffer_weights and _HAS_PIPELINE_MODE:
        try:
            y = run(True)
        except Exception:                           # version fallback: double-buffered consts
            y = run(False)
    else:
        y = run(False)

    if keep_padded_channels or Coutp == Cout:
        return y
    return y[:, :, :Cout]


def temporal_block(x, w1, b1, w2, b2, wd=None, bd=None, *, kernel_size, stride,
                   dilation, padding, **kwargs):
    """PyTorch-layout wrapper: x (B, Cin, L) -> (B, Cout, L).

    Layout plumbing (NCL<->NLC transpose, channel pad, output slice) lives only here at
    the stack boundary; stacked TCNs should chain `temporal_block_nlc` directly with
    keep_padded_channels=True (and optionally bf16 activations) to avoid these extra
    HBM passes per block.
    """
    y_nlc = temporal_block_nlc(jnp.transpose(x, (0, 2, 1)), w1, b1, w2, b2, wd, bd,
                               kernel_size=kernel_size, stride=stride,
                               dilation=dilation, padding=padding, **kwargs)
    return jnp.transpose(y_nlc, (0, 2, 1))


# ----------------------- pure-JAX reference (for checking) -----------------------
def _reference(x, w1, b1, w2, b2, wd, bd, *, dilation, pad):
    def conv1d_causal(inp, w, b, d, p):
        # Left-only pad of p == pad-both-sides + trim-right for p=(K-1)*d (and p=0 for 1x1).
        y = jax.lax.conv_general_dilated(
            inp, w, window_strides=(1,), padding=[(p, 0)], rhs_dilation=(d,),
            dimension_numbers=('NCH', 'OIH', 'NCH'))
        return y + b[None, :, None]

    out = jnp.maximum(conv1d_causal(x, w1, b1, dilation, pad), 0.0)
    out = jnp.maximum(conv1d_causal(out, w2, b2, dilation, pad), 0.0)
    res = x if wd is None else conv1d_causal(x, wd, bd, 1, 0)
    return jnp.maximum(out + res, 0.0)


def _weight_norm_effective(v, g=None):
    """weight_norm: w = g * v / ||v|| (norm over non-output dims).

    PyTorch initializes g = ||v||, so the effective initial weight equals v; for a
    trained checkpoint pass the learned g explicitly.
    """
    norm = jnp.sqrt(jnp.sum(v * v, axis=(1, 2), keepdims=True))
    if g is None:
        g = norm
    return g * v / norm


if __name__ == "__main__":
    key = jax.random.PRNGKey(0)
    ks = jax.random.split(key, 24)

    # ---- case 1: Cin != Cout (downsample path), single time tile, PyTorch layout ----
    B, Cin, Cout, L = 2, 4, 8, 16
    K, stride, dilation = 3, 1, 2
    padding = (K - 1) * dilation  # 4

    x = jax.random.normal(ks[0], (B, Cin, L), jnp.float32)
    w1 = _weight_norm_effective(0.01 * jax.random.normal(ks[1], (Cout, Cin, K), jnp.float32))
    w2 = _weight_norm_effective(0.01 * jax.random.normal(ks[2], (Cout, Cout, K), jnp.float32))
    b1 = 0.01 * jax.random.normal(ks[3], (Cout,), jnp.float32)
    b2 = 0.01 * jax.random.normal(ks[4], (Cout,), jnp.float32)
    wd = 0.01 * jax.random.normal(ks[5], (Cout, Cin, 1), jnp.float32)
    bd = 0.01 * jax.random.normal(ks[6], (Cout,), jnp.float32)

    y = temporal_block(x, w1, b1, w2, b2, wd, bd,
                       kernel_size=K, stride=stride, dilation=dilation, padding=padding)
    y = jax.block_until_ready(y)
    y_ref = _reference(x, w1, b1, w2, b2, wd, bd, dilation=dilation, pad=padding)
    assert y.shape == (B, Cout, L)
    assert jnp.allclose(y, y_ref, atol=3e-3, rtol=3e-2), "case1 mismatch vs JAX reference"

    # ---- case 2: Cin == Cout (identity residual), time-tiled with halo (nT = 2) ----
    B2, C2, L2 = 2, 8, 32
    K2, d2 = 3, 1
    pad2 = (K2 - 1) * d2  # 2

    x2 = jax.random.normal(ks[7], (B2, C2, L2), jnp.float32)
    w1b = _weight_norm_effective(0.01 * jax.random.normal(ks[8], (C2, C2, K2), jnp.float32))
    w2b = _weight_norm_effective(0.01 * jax.random.normal(ks[9], (C2, C2, K2), jnp.float32))
    b1b = 0.01 * jax.random.normal(ks[10], (C2,), jnp.float32)
    b2b = 0.01 * jax.random.normal(ks[11], (C2,), jnp.float32)

    y2 = temporal_block(x2, w1b, b1b, w2b, b2b, None, None,
                        kernel_size=K2, stride=1, dilation=d2, padding=pad2,
                        time_tile=16)  # exercises the halo / time-tiling path
    y2 = jax.block_until_ready(y2)
    y2_ref = _reference(x2, w1b, b1b, w2b, b2b, None, None, dilation=d2, pad=pad2)
    assert y2.shape == (B2, C2, L2)
    assert jnp.allclose(y2, y2_ref, atol=3e-3, rtol=3e-2), "case2 mismatch vs JAX reference"

    # ---- case 3: stacked two blocks on the channels-last fast path -----------------
    # Block A: 4 -> 8 (downsample, d=1), Block B: 8 -> 8 (identity, d=2). The blocks are
    # chained channels-last with padded channels and a bf16 inter-block activation: no
    # transpose / pad / slice HBM passes between blocks, half the inter-block DMA bytes.
    B3, C3in, C3mid, L3 = 2, 4, 8, 32
    KA, dA = 3, 1
    padA = (KA - 1) * dA  # 2
    KB, dB = 3, 2
    padB = (KB - 1) * dB  # 4

    x3 = jax.random.normal(ks[12], (B3, C3in, L3), jnp.float32)
    wA1 = _weight_norm_effective(0.01 * jax.random.normal(ks[13], (C3mid, C3in, KA), jnp.float32))
    wA2 = _weight_norm_effective(0.01 * jax.random.normal(ks[14], (C3mid, C3mid, KA), jnp.float32))
    bA1 = 0.01 * jax.random.normal(ks[15], (C3mid,), jnp.float32)
    bA2 = 0.01 * jax.random.normal(ks[16], (C3mid,), jnp.float32)
    wAd = 0.01 * jax.random.normal(ks[17], (C3mid, C3in, 1), jnp.float32)
    bAd = 0.01 * jax.random.normal(ks[18], (C3mid,), jnp.float32)
    wB1 = _weight_norm_effective(0.01 * jax.random.normal(ks[19], (C3mid, C3mid, KB), jnp.float32))
    wB2 = _weight_norm_effective(0.01 * jax.random.normal(ks[20], (C3mid, C3mid, KB), jnp.float32))
    bB1 = 0.01 * jax.random.normal(ks[21], (C3mid,), jnp.float32)
    bB2 = 0.01 * jax.random.normal(ks[22], (C3mid,), jnp.float32)

    x3_nlc = jnp.transpose(x3, (0, 2, 1))                       # layout once, at stack entry
    hA = temporal_block_nlc(x3_nlc, wA1, bA1, wA2, bA2, wAd, bAd,
                            kernel_size=KA, stride=1, dilation=dA, padding=padA,
                            time_tile=16, keep_padded_channels=True,
                            out_dtype=jnp.bfloat16)             # bf16 inter-block DMA
    y3_nlc = temporal_block_nlc(hA, wB1, bB1, wB2, bB2, None, None,
                                kernel_size=KB, stride=1, dilation=dB, padding=padB,
                                time_tile=16, keep_padded_channels=False,
                                out_dtype=jnp.float32)
    y3 = jax.block_until_ready(jnp.transpose(y3_nlc, (0, 2, 1)))  # layout once, at stack exit

    y3_refA = _reference(x3, wA1, bA1, wA2, bA2, wAd, bAd, dilation=dA, pad=padA)
    y3_ref = _reference(y3_refA, wB1, bB1, wB2, bB2, None, None, dilation=dB, pad=padB)
    assert y3.shape == (B3, C3mid, L3)
    assert jnp.allclose(y3, y3_ref, atol=5e-3, rtol=3e-2), "case3 (stacked) mismatch vs JAX reference"

    print("KERNEL_OK")
</pallas_src>

<mosaic_0001>
module attributes {stable_mosaic.version = 11 : i64} {
  func.func @_temporal_block_kernel(%arg0: i32, %arg1: i32, %arg2: memref<1x16x128xf32, #tpu.memory_space<vmem>>, %arg3: memref<3x128x128xbf16, #tpu.memory_space<vmem>>, %arg4: memref<1x128xf32, #tpu.memory_space<vmem>>, %arg5: memref<3x128x128xbf16, #tpu.memory_space<vmem>>, %arg6: memref<1x128xf32, #tpu.memory_space<vmem>>, %arg7: memref<128x128xbf16, #tpu.memory_space<vmem>>, %arg8: memref<1x128xf32, #tpu.memory_space<vmem>>, %arg9: memref<1x16x128xf32, #tpu.memory_space<vmem>>) attributes {dimension_semantics = [#tpu.dimension_semantics<parallel>, #tpu.dimension_semantics<parallel>], iteration_bounds = array<i64: 2, 1>, scalar_prefetch = 0 : i64, scratch_operands = 0 : i64, tpu.core_type = #tpu.core_type<tc>, window_params = [{transform_indices = @transform_0, window_bounds = array<i64: 1, 16, 128>}, {pipeline_mode = #tpu.pipeline_mode<synchronous>, transform_indices = @transform_1, window_bounds = array<i64: 3, 128, 128>}, {pipeline_mode = #tpu.pipeline_mode<synchronous>, transform_indices = @transform_2, window_bounds = array<i64: 1, 128>}, {pipeline_mode = #tpu.pipeline_mode<synchronous>, transform_indices = @transform_3, window_bounds = array<i64: 3, 128, 128>}, {pipeline_mode = #tpu.pipeline_mode<synchronous>, transform_indices = @transform_4, window_bounds = array<i64: 1, 128>}, {pipeline_mode = #tpu.pipeline_mode<synchronous>, transform_indices = @transform_5, window_bounds = array<i64: 128, 128>}, {pipeline_mode = #tpu.pipeline_mode<synchronous>, transform_indices = @transform_6, window_bounds = array<i64: 1, 128>}, {transform_indices = @transform_7, window_bounds = array<i64: 1, 16, 128>}]} {
    %c0 = arith.constant 0 : index
    %c0_0 = arith.constant 0 : index
    %c0_1 = arith.constant 0 : index
    %0 = vector.load %arg2[%c0, %c0_0, %c0_1] : memref<1x16x128xf32, #tpu.memory_space<vmem>>, vector<1x16x128xf32>
    %1 = vector.shape_cast %0 : vector<1x16x128xf32> to vector<16x128xf32>
    %2 = arith.truncf %1 : vector<16x128xf32> to vector<16x128xbf16>
    %cst = arith.constant 0.000000e+00 : bf16
    %3 = vector.broadcast %cst : bf16 to vector<8x128xbf16>
    %4 = tpu.concatenate %3, %2 in 0 : vector<8x128xbf16>, vector<16x128xbf16> -> vector<24x128xbf16>
    %c0_2 = arith.constant 0 : index
    %c0_3 = arith.constant 0 : index
    %5 = vector.load %arg4[%c0_2, %c0_3] : memref<1x128xf32, #tpu.memory_space<vmem>>, vector<1x128xf32>
    %6 = vector.extract_strided_slice %4 {offsets = [0, 0], sizes = [20, 128], strides = [1, 1]} : vector<24x128xbf16> to vector<20x128xbf16>
    %c0_4 = arith.constant 0 : index
    %c0_5 = arith.constant 0 : index
    %c0_6 = arith.constant 0 : index
    %7 = vector.load %arg3[%c0_4, %c0_5, %c0_6] : memref<3x128x128xbf16, #tpu.memory_space<vmem>>, vector<1x128x128xbf16>
    %8 = vector.shape_cast %7 : vector<1x128x128xbf16> to vector<128x128xbf16>
    %cst_7 = arith.constant dense<0.000000e+00> : vector<20x128xf32>
    %9 = tpu.matmul %6, %8, %cst_7 {dimension_numbers = #tpu.dot_dimension_numbers<[1], [0], [0], [1], [0, 0, 1, 1], [], []>} : vector<20x128xbf16>, vector<128x128xbf16>, vector<20x128xf32> -> vector<20x128xf32>
    %10 = vector.broadcast %5 : vector<1x128xf32> to vector<20x128xf32>
    %11 = arith.addf %10, %9 : vector<20x128xf32>
    %12 = vector.extract_strided_slice %4 {offsets = [2, 0], sizes = [20, 128], strides = [1, 1]} : vector<24x128xbf16> to vector<20x128xbf16>
    %c1 = arith.constant 1 : index
    %c0_8 = arith.constant 0 : index
    %c0_9 = arith.constant 0 : index
    %13 = vector.load %arg3[%c1, %c0_8, %c0_9] : memref<3x128x128xbf16, #tpu.memory_space<vmem>>, vector<1x128x128xbf16>
    %14 = vector.shape_cast %13 : vector<1x128x128xbf16> to vector<128x128xbf16>
    %cst_10 = arith.constant dense<0.000000e+00> : vector<20x128xf32>
    %15 = tpu.matmul %12, %14, %cst_10 {dimension_numbers = #tpu.dot_dimension_numbers<[1], [0], [0], [1], [0, 0, 1, 1], [], []>} : vector<20x128xbf16>, vector<128x128xbf16>, vector<20x128xf32> -> vector<20x128xf32>
    %16 = arith.addf %11, %15 : vector<20x128xf32>
    %17 = vector.extract_strided_slice %4 {offsets = [4, 0], sizes = [20, 128], strides = [1, 1]} : vector<24x128xbf16> to vector<20x128xbf16>
    %c2 = arith.constant 2 : index
    %c0_11 = arith.constant 0 : index
    %c0_12 = arith.constant 0 : index
    %18 = vector.load %arg3[%c2, %c0_11, %c0_12] : memref<3x128x128xbf16, #tpu.memory_space<vmem>>, vector<1x128x128xbf16>
    %19 = vector.shape_cast %18 : vector<1x128x128xbf16> to vector<128x128xbf16>
    %cst_13 = arith.constant dense<0.000000e+00> : vector<20x128xf32>
    %20 = tpu.matmul %17, %19, %cst_13 {dimension_numbers = #tpu.dot_dimension_numbers<[1], [0], [0], [1], [0, 0, 1, 1], [], []>} : vector<20x128xbf16>, vector<128x128xbf16>, vector<20x128xf32> -> vector<20x128xf32>
    %21 = arith.addf %16, %20 : vector<20x128xf32>
    %cst_14 = arith.constant 0.000000e+00 : f32
    %22 = vector.broadcast %cst_14 : f32 to vector<20x128xf32>
    %23 = arith.maximumf %21, %22 : vector<20x128xf32>
    %c16_i32 = arith.constant 16 : i32
    %24 = arith.muli %arg1, %c16_i32 : i32
    %c4_i32 = arith.constant 4 : i32
    %25 = arith.subi %24, %c4_i32 : i32
    %26 = tpu.iota {dimensions = array<i32: 0>} : vector<20x1xi32>
    %27 = vector.broadcast %25 : i32 to vector<20x1xi32>
    %28 = arith.addi %27, %26 : vector<20x1xi32>
    %c0_i32 = arith.constant 0 : i32
    %29 = vector.broadcast %c0_i32 : i32 to vector<20x1xi32>
    %30 = arith.cmpi sge, %28, %29 : vector<20x1xi32>
    %cst_15 = arith.constant 0.000000e+00 : f32
    %31 = vector.shape_cast %30 : vector<20x1xi1> to vector<20x1xi1>
    %32 = vector.broadcast %31 : vector<20x1xi1> to vector<20x128xi1>
    %33 = vector.broadcast %cst_15 : f32 to vector<20x128xf32>
    %34 = arith.select %32, %23, %33 : vector<20x128xi1>, vector<20x128xf32>
    %35 = arith.truncf %34 : vector<20x128xf32> to vector<20x128xbf16>
    %c0_16 = arith.constant 0 : index
    %c0_17 = arith.constant 0 : index
    %36 = vector.load %arg6[%c0_16, %c0_17] : memref<1x128xf32, #tpu.memory_space<vmem>>, vector<1x128xf32>
    %37 = vector.extract_strided_slice %35 {offsets = [0, 0], sizes = [16, 128], strides = [1, 1]} : vector<20x128xbf16> to vector<16x128xbf16>
    %c0_18 = arith.constant 0 : index
    %c0_19 = arith.constant 0 : index
    %c0_20 = arith.constant 0 : index
    %38 = vector.load %arg5[%c0_18, %c0_19, %c0_20] : memref<3x128x128xbf16, #tpu.memory_space<vmem>>, vector<1x128x128xbf16>
    %39 = vector.shape_cast %38 : vector<1x128x128xbf16> to vector<128x128xbf16>
    %cst_21 = arith.constant dense<0.000000e+00> : vector<16x128xf32>
    %40 = tpu.matmul %37, %39, %cst_21 {dimension_numbers = #tpu.dot_dimension_numbers<[1], [0], [0], [1], [0, 0, 1, 1], [], []>} : vector<16x128xbf16>, vector<128x128xbf16>, vector<16x128xf32> -> vector<16x128xf32>
    %41 = vector.broadcast %36 : vector<1x128xf32> to vector<16x128xf32>
    %42 = arith.addf %41, %40 : vector<16x128xf32>
    %43 = vector.extract_strided_slice %35 {offsets = [2, 0], sizes = [16, 128], strides = [1, 1]} : vector<20x128xbf16> to vector<16x128xbf16>
    %c1_22 = arith.constant 1 : index
    %c0_23 = arith.constant 0 : index
    %c0_24 = arith.constant 0 : index
    %44 = vector.load %arg5[%c1_22, %c0_23, %c0_24] : memref<3x128x128xbf16, #tpu.memory_space<vmem>>, vector<1x128x128xbf16>
    %45 = vector.shape_cast %44 : vector<1x128x128xbf16> to vector<128x128xbf16>
    %cst_25 = arith.constant dense<0.000000e+00> : vector<16x128xf32>
    %46 = tpu.matmul %43, %45, %cst_25 {dimension_numbers = #tpu.dot_dimension_numbers<[1], [0], [0], [1], [0, 0, 1, 1], [], []>} : vector<16x128xbf16>, vector<128x128xbf16>, vector<16x128xf32> -> vector<16x128xf32>
    %47 = arith.addf %42, %46 : vector<16x128xf32>
    %48 = vector.extract_strided_slice %35 {offsets = [4, 0], sizes = [16, 128], strides = [1, 1]} : vector<20x128xbf16> to vector<16x128xbf16>
    %c2_26 = arith.constant 2 : index
    %c0_27 = arith.constant 0 : index
    %c0_28 = arith.constant 0 : index
    %49 = vector.load %arg5[%c2_26, %c0_27, %c0_28] : memref<3x128x128xbf16, #tpu.memory_space<vmem>>, vector<1x128x128xbf16>
    %50 = vector.shape_cast %49 : vector<1x128x128xbf16> to vector<128x128xbf16>
    %cst_29 = arith.constant dense<0.000000e+00> : vector<16x128xf32>
    %51 = tpu.matmul %48, %50, %cst_29 {dimension_numbers = #tpu.dot_dimension_numbers<[1], [0], [0], [1], [0, 0, 1, 1], [], []>} : vector<16x128xbf16>, vector<128x128xbf16>, vector<16x128xf32> -> vector<16x128xf32>
    %52 = arith.addf %47, %51 : vector<16x128xf32>
    %cst_30 = arith.constant 0.000000e+00 : f32
    %53 = vector.broadcast %cst_30 : f32 to vector<16x128xf32>
    %54 = arith.maximumf %52, %53 : vector<16x128xf32>
    %c0_31 = arith.constant 0 : index
    %c0_32 = arith.constant 0 : index
    %55 = vector.load %arg7[%c0_31, %c0_32] : memref<128x128xbf16, #tpu.memory_space<vmem>>, vector<128x128xbf16>
    %cst_33 = arith.constant dense<0.000000e+00> : vector<16x128xf32>
    %56 = tpu.matmul %2, %55, %cst_33 {dimension_numbers = #tpu.dot_dimension_numbers<[1], [0], [0], [1], [0, 0, 1, 1], [], []>} : vector<16x128xbf16>, vector<128x128xbf16>, vector<16x128xf32> -> vector<16x128xf32>
    %c0_34 = arith.constant 0 : index
    %c0_35 = arith.constant 0 : index
    %57 = vector.load %arg8[%c0_34, %c0_35] : memref<1x128xf32, #tpu.memory_space<vmem>>, vector<1x128xf32>
    %58 = vector.broadcast %57 : vector<1x128xf32> to vector<16x128xf32>
    %59 = arith.addf %56, %58 : vector<16x128xf32>
    %60 = arith.addf %54, %59 : vector<16x128xf32>
    %cst_36 = arith.constant 0.000000e+00 : f32
    %61 = vector.broadcast %cst_36 : f32 to vector<16x128xf32>
    %62 = arith.maximumf %60, %61 : vector<16x128xf32>
    %c0_37 = arith.constant 0 : index
    %c0_38 = arith.constant 0 : index
    %c0_39 = arith.constant 0 : index
    %63 = vector.load %arg9[%c0_37, %c0_38, %c0_39] : memref<1x16x128xf32, #tpu.memory_space<vmem>>, vector<1x16x128xf32>
    %64 = vector.shape_cast %63 : vector<1x16x128xf32> to vector<16x128xf32>
    %65 = vector.shape_cast %62 : vector<16x128xf32> to vector<1x16x128xf32>
    tpu.vector_store %arg9[%c0_37, %c0_38, %c0_39], %65 {strides = array<i32>} : memref<1x16x128xf32, #tpu.memory_space<vmem>>, vector<1x16x128xf32>,
    return
  }
  func.func @transform_0(%arg0: i32, %arg1: i32) -> (i32, i32, i32) {
    %c0_i32 = arith.constant 0 : i32
    %c0_i32_0 = arith.constant 0 : i32
    return %arg0, %arg1, %c0_i32 : i32, i32, i32
  }
  func.func @transform_1(%arg0: i32, %arg1: i32) -> (i32, i32, i32) {
    %c0_i32 = arith.constant 0 : i32
    %c0_i32_0 = arith.constant 0 : i32
    %c0_i32_1 = arith.constant 0 : i32
    %c0_i32_2 = arith.constant 0 : i32
    return %c0_i32, %c0_i32_0, %c0_i32_1 : i32, i32, i32
  }
  func.func @transform_2(%arg0: i32, %arg1: i32) -> (i32, i32) {
    %c0_i32 = arith.constant 0 : i32
    %c0_i32_0 = arith.constant 0 : i32
    %c0_i32_1 = arith.constant 0 : i32
    return %c0_i32, %c0_i32_0 : i32, i32
  }
  func.func @transform_3(%arg0: i32, %arg1: i32) -> (i32, i32, i32) {
    %c0_i32 = arith.constant 0 : i32
    %c0_i32_0 = arith.constant 0 : i32
    %c0_i32_1 = arith.constant 0 : i32
    %c0_i32_2 = arith.constant 0 : i32
    return %c0_i32, %c0_i32_0, %c0_i32_1 : i32, i32, i32
  }
  func.func @transform_4(%arg0: i32, %arg1: i32) -> (i32, i32) {
    %c0_i32 = arith.constant 0 : i32
    %c0_i32_0 = arith.constant 0 : i32
    %c0_i32_1 = arith.constant 0 : i32
    return %c0_i32, %c0_i32_0 : i32, i32
  }
  func.func @transform_5(%arg0: i32, %arg1: i32) -> (i32, i32) {
    %c0_i32 = arith.constant 0 : i32
    %c0_i32_0 = arith.constant 0 : i32
    %c0_i32_1 = arith.constant 0 : i32
    return %c0_i32, %c0_i32_0 : i32, i32
  }
  func.func @transform_6(%arg0: i32, %arg1: i32) -> (i32, i32) {
    %c0_i32 = arith.constant 0 : i32
    %c0_i32_0 = arith.constant 0 : i32
    %c0_i32_1 = arith.constant 0 : i32
    return %c0_i32, %c0_i32_0 : i32, i32
  }
  func.func @transform_7(%arg0: i32, %arg1: i32) -> (i32, i32, i32) {
    %c0_i32 = arith.constant 0 : i32
    %c0_i32_0 = arith.constant 0 : i32
    return %arg0, %arg1, %c0_i32 : i32, i32, i32
  }
}

module attributes {stable_mosaic.version = 11 : i64} {
  func.func @_temporal_block_kernel(%arg0: i32, %arg1: i32, %arg2: memref<1x16x128xf32, #tpu.memory_space<vmem>>, %arg3: memref<3x128x128xbf16, #tpu.memory_space<vmem>>, %arg4: memref<1x128xf32, #tpu.memory_space<vmem>>, %arg5: memref<3x128x128xbf16, #tpu.memory_space<vmem>>, %arg6: memref<1x128xf32, #tpu.memory_space<vmem>>, %arg7: memref<128x128xbf16, #tpu.memory_space<vmem>>, %arg8: memref<1x128xf32, #tpu.memory_space<vmem>>, %arg9: memref<1x16x128xf32, #tpu.memory_space<vmem>>) attributes {dimension_semantics = [#tpu.dimension_semantics<parallel>, #tpu.dimension_semantics<parallel>], iteration_bounds = array<i64: 2, 1>, scalar_prefetch = 0 : i64, scratch_operands = 0 : i64, tpu.core_type = #tpu.core_type<tc>, window_params = [{transform_indices = @transform_0, window_bounds = array<i64: 1, 16, 128>}, {pipeline_mode = #tpu.pipeline_mode<synchronous>, transform_indices = @transform_1, window_bounds = array<i64: 3, 128, 128>}, {pipeline_mode = #tpu.pipeline_mode<synchronous>, transform_indices = @transform_2, window_bounds = array<i64: 1, 128>}, {pipeline_mode = #tpu.pipeline_mode<synchronous>, transform_indices = @transform_3, window_bounds = array<i64: 3, 128, 128>}, {pipeline_mode = #tpu.pipeline_mode<synchronous>, transform_indices = @transform_4, window_bounds = array<i64: 1, 128>}, {pipeline_mode = #tpu.pipeline_mode<synchronous>, transform_indices = @transform_5, window_bounds = array<i64: 128, 128>}, {pipeline_mode = #tpu.pipeline_mode<synchronous>, transform_indices = @transform_6, window_bounds = array<i64: 1, 128>}, {transform_indices = @transform_7, window_bounds = array<i64: 1, 16, 128>}]} {
    %c0 = arith.constant 0 : index
    %c0_0 = arith.constant 0 : index
    %c0_1 = arith.constant 0 : index
    %0 = vector.load %arg2[%c0, %c0_0, %c0_1] : memref<1x16x128xf32, #tpu.memory_space<vmem>>, vector<1x16x128xf32>
    %1 = vector.shape_cast %0 : vector<1x16x128xf32> to vector<16x128xf32>
    %2 = arith.truncf %1 : vector<16x128xf32> to vector<16x128xbf16>
    %cst = arith.constant 0.000000e+00 : bf16
    %3 = vector.broadcast %cst : bf16 to vector<8x128xbf16>
    %4 = tpu.concatenate %3, %2 in 0 : vector<8x128xbf16>, vector<16x128xbf16> -> vector<24x128xbf16>
    %c0_2 = arith.constant 0 : index
    %c0_3 = arith.constant 0 : index
    %5 = vector.load %arg4[%c0_2, %c0_3] : memref<1x128xf32, #tpu.memory_space<vmem>>, vector<1x128xf32>
    %6 = vector.extract_strided_slice %4 {offsets = [0, 0], sizes = [20, 128], strides = [1, 1]} : vector<24x128xbf16> to vector<20x128xbf16>
    %c0_4 = arith.constant 0 : index
    %c0_5 = arith.constant 0 : index
    %c0_6 = arith.constant 0 : index
    %7 = vector.load %arg3[%c0_4, %c0_5, %c0_6] : memref<3x128x128xbf16, #tpu.memory_space<vmem>>, vector<1x128x128xbf16>
    %8 = vector.shape_cast %7 : vector<1x128x128xbf16> to vector<128x128xbf16>
    %cst_7 = arith.constant dense<0.000000e+00> : vector<20x128xf32>
    %9 = tpu.matmul %6, %8, %cst_7 {dimension_numbers = #tpu.dot_dimension_numbers<[1], [0], [0], [1], [0, 0, 1, 1], [], []>} : vector<20x128xbf16>, vector<128x128xbf16>, vector<20x128xf32> -> vector<20x128xf32>
    %10 = vector.broadcast %5 : vector<1x128xf32> to vector<20x128xf32>
    %11 = arith.addf %10, %9 : vector<20x128xf32>
    %12 = vector.extract_strided_slice %4 {offsets = [2, 0], sizes = [20, 128], strides = [1, 1]} : vector<24x128xbf16> to vector<20x128xbf16>
    %c1 = arith.constant 1 : index
    %c0_8 = arith.constant 0 : index
    %c0_9 = arith.constant 0 : index
    %13 = vector.load %arg3[%c1, %c0_8, %c0_9] : memref<3x128x128xbf16, #tpu.memory_space<vmem>>, vector<1x128x128xbf16>
    %14 = vector.shape_cast %13 : vector<1x128x128xbf16> to vector<128x128xbf16>
    %cst_10 = arith.constant dense<0.000000e+00> : vector<20x128xf32>
    %15 = tpu.matmul %12, %14, %cst_10 {dimension_numbers = #tpu.dot_dimension_numbers<[1], [0], [0], [1], [0, 0, 1, 1], [], []>} : vector<20x128xbf16>, vector<128x128xbf16>, vector<20x128xf32> -> vector<20x128xf32>
    %16 = arith.addf %11, %15 : vector<20x128xf32>
    %17 = vector.extract_strided_slice %4 {offsets = [4, 0], sizes = [20, 128], strides = [1, 1]} : vector<24x128xbf16> to vector<20x128xbf16>
    %c2 = arith.constant 2 : index
    %c0_11 = arith.constant 0 : index
    %c0_12 = arith.constant 0 : index
    %18 = vector.load %arg3[%c2, %c0_11, %c0_12] : memref<3x128x128xbf16, #tpu.memory_space<vmem>>, vector<1x128x128xbf16>
    %19 = vector.shape_cast %18 : vector<1x128x128xbf16> to vector<128x128xbf16>
    %cst_13 = arith.constant dense<0.000000e+00> : vector<20x128xf32>
    %20 = tpu.matmul %17, %19, %cst_13 {dimension_numbers = #tpu.dot_dimension_numbers<[1], [0], [0], [1], [0, 0, 1, 1], [], []>} : vector<20x128xbf16>, vector<128x128xbf16>, vector<20x128xf32> -> vector<20x128xf32>
    %21 = arith.addf %16, %20 : vector<20x128xf32>
    %cst_14 = arith.constant 0.000000e+00 : f32
    %22 = vector.broadcast %cst_14 : f32 to vector<20x128xf32>
    %23 = arith.maximumf %21, %22 : vector<20x128xf32>
    %c16_i32 = arith.constant 16 : i32
    %24 = arith.muli %arg1, %c16_i32 : i32
    %c4_i32 = arith.constant 4 : i32
    %25 = arith.subi %24, %c4_i32 : i32
    %26 = tpu.iota {dimensions = array<i32: 0>} : vector<20x1xi32>
    %27 = vector.broadcast %25 : i32 to vector<20x1xi32>
    %28 = arith.addi %27, %26 : vector<20x1xi32>
    %c0_i32 = arith.constant 0 : i32
    %29 = vector.broadcast %c0_i32 : i32 to vector<20x1xi32>
    %30 = arith.cmpi sge, %28, %29 : vector<20x1xi32>
    %cst_15 = arith.constant 0.000000e+00 : f32
    %31 = vector.shape_cast %30 : vector<20x1xi1> to vector<20x1xi1>
    %32 = vector.broadcast %31 : vector<20x1xi1> to vector<20x128xi1>
    %33 = vector.broadcast %cst_15 : f32 to vector<20x128xf32>
    %34 = arith.select %32, %23, %33 : vector<20x128xi1>, vector<20x128xf32>
    %35 = arith.truncf %34 : vector<20x128xf32> to vector<20x128xbf16>
    %c0_16 = arith.constant 0 : index
    %c0_17 = arith.constant 0 : index
    %36 = vector.load %arg6[%c0_16, %c0_17] : memref<1x128xf32, #tpu.memory_space<vmem>>, vector<1x128xf32>
    %37 = vector.extract_strided_slice %35 {offsets = [0, 0], sizes = [16, 128], strides = [1, 1]} : vector<20x128xbf16> to vector<16x128xbf16>
    %c0_18 = arith.constant 0 : index
    %c0_19 = arith.constant 0 : index
    %c0_20 = arith.constant 0 : index
    %38 = vector.load %arg5[%c0_18, %c0_19, %c0_20] : memref<3x128x128xbf16, #tpu.memory_space<vmem>>, vector<1x128x128xbf16>
    %39 = vector.shape_cast %38 : vector<1x128x128xbf16> to vector<128x128xbf16>
    %cst_21 = arith.constant dense<0.000000e+00> : vector<16x128xf32>
    %40 = tpu.matmul %37, %39, %cst_21 {dimension_numbers = #tpu.dot_dimension_numbers<[1], [0], [0], [1], [0, 0, 1, 1], [], []>} : vector<16x128xbf16>, vector<128x128xbf16>, vector<16x128xf32> -> vector<16x128xf32>
    %41 = vector.broadcast %36 : vector<1x128xf32> to vector<16x128xf32>
    %42 = arith.addf %41, %40 : vector<16x128xf32>
    %43 = vector.extract_strided_slice %35 {offsets = [2, 0], sizes = [16, 128], strides = [1, 1]} : vector<20x128xbf16> to vector<16x128xbf16>
    %c1_22 = arith.constant 1 : index
    %c0_23 = arith.constant 0 : index
    %c0_24 = arith.constant 0 : index
    %44 = vector.load %arg5[%c1_22, %c0_23, %c0_24] : memref<3x128x128xbf16, #tpu.memory_space<vmem>>, vector<1x128x128xbf16>
    %45 = vector.shape_cast %44 : vector<1x128x128xbf16> to vector<128x128xbf16>
    %cst_25 = arith.constant dense<0.000000e+00> : vector<16x128xf32>
    %46 = tpu.matmul %43, %45, %cst_25 {dimension_numbers = #tpu.dot_dimension_numbers<[1], [0], [0], [1], [0, 0, 1, 1], [], []>} : vector<16x128xbf16>, vector<128x128xbf16>, vector<16x128xf32> -> vector<16x128xf32>
    %47 = arith.addf %42, %46 : vector<16x128xf32>
    %48 = vector.extract_strided_slice %35 {offsets = [4, 0], sizes = [16, 128], strides = [1, 1]} : vector<20x128xbf16> to vector<16x128xbf16>
    %c2_26 = arith.constant 2 : index
    %c0_27 = arith.constant 0 : index
    %c0_28 = arith.constant 0 : index
    %49 = vector.load %arg5[%c2_26, %c0_27, %c0_28] : memref<3x128x128xbf16, #tpu.memory_space<vmem>>, vector<1x128x128xbf16>
    %50 = vector.shape_cast %49 : vector<1x128x128xbf16> to vector<128x128xbf16>
    %cst_29 = arith.constant dense<0.000000e+00> : vector<16x128xf32>
    %51 = tpu.matmul %48, %50, %cst_29 {dimension_numbers = #tpu.dot_dimension_numbers<[1], [0], [0], [1], [0, 0, 1, 1], [], []>} : vector<16x128xbf16>, vector<128x128xbf16>, vector<16x128xf32> -> vector<16x128xf32>
    %52 = arith.addf %47, %51 : vector<16x128xf32>
    %cst_30 = arith.constant 0.000000e+00 : f32
    %53 = vector.broadcast %cst_30 : f32 to vector<16x128xf32>
    %54 = arith.maximumf %52, %53 : vector<16x128xf32>
    %c0_31 = arith.constant 0 : index
    %c0_32 = arith.constant 0 : index
    %55 = vector.load %arg7[%c0_31, %c0_32] : memref<128x128xbf16, #tpu.memory_space<vmem>>, vector<128x128xbf16>
    %cst_33 = arith.constant dense<0.000000e+00> : vector<16x128xf32>
    %56 = tpu.matmul %2, %55, %cst_33 {dimension_numbers = #tpu.dot_dimension_numbers<[1], [0], [0], [1], [0, 0, 1, 1], [], []>} : vector<16x128xbf16>, vector<128x128xbf16>, vector<16x128xf32> -> vector<16x128xf32>
    %c0_34 = arith.constant 0 : index
    %c0_35 = arith.constant 0 : index
    %57 = vector.load %arg8[%c0_34, %c0_35] : memref<1x128xf32, #tpu.memory_space<vmem>>, vector<1x128xf32>
    %58 = vector.broadcast %57 : vector<1x128xf32> to vector<16x128xf32>
    %59 = arith.addf %56, %58 : vector<16x128xf32>
    %60 = arith.addf %54, %59 : vector<16x128xf32>
    %cst_36 = arith.constant 0.000000e+00 : f32
    %61 = vector.broadcast %cst_36 : f32 to vector<16x128xf32>
    %62 = arith.maximumf %60, %61 : vector<16x128xf32>
    %c0_37 = arith.constant 0 : index
    %c0_38 = arith.constant 0 : index
    %c0_39 = arith.constant 0 : index
    %63 = vector.load %arg9[%c0_37, %c0_38, %c0_39] : memref<1x16x128xf32, #tpu.memory_space<vmem>>, vector<1x16x128xf32>
    %64 = vector.shape_cast %63 : vector<1x16x128xf32> to vector<16x128xf32>
    %65 = vector.shape_cast %62 : vector<16x128xf32> to vector<1x16x128xf32>
    tpu.vector_store %arg9[%c0_37, %c0_38, %c0_39], %65 {strides = array<i32>} : memref<1x16x128xf32, #tpu.memory_space<vmem>>, vector<1x16x128xf32>,
    return
  }
  func.func @transform_0(%arg0: i32, %arg1: i32) -> (i32, i32, i32) {
    %c0_i32 = arith.constant 0 : i32
    %c0_i32_0 = arith.constant 0 : i32
    return %arg0, %arg1, %c0_i32 : i32, i32, i32
  }
  func.func @transform_1(%arg0: i32, %arg1: i32) -> (i32, i32, i32) {
    %c0_i32 = arith.constant 0 : i32
    %c0_i32_0 = arith.constant 0 : i32
    %c0_i32_1 = arith.constant 0 : i32
    %c0_i32_2 = arith.constant 0 : i32
    return %c0_i32, %c0_i32_0, %c0_i32_1 : i32, i32, i32
  }
  func.func @transform_2(%arg0: i32, %arg1: i32) -> (i32, i32) {
    %c0_i32 = arith.constant 0 : i32
    %c0_i32_0 = arith.constant 0 : i32
    %c0_i32_1 = arith.constant 0 : i32
    return %c0_i32, %c0_i32_0 : i32, i32
  }
  func.func @transform_3(%arg0: i32, %arg1: i32) -> (i32, i32, i32) {
    %c0_i32 = arith.constant 0 : i32
    %c0_i32_0 = arith.constant 0 : i32
    %c0_i32_1 = arith.constant 0 : i32
    %c0_i32_2 = arith.constant 0 : i32
    return %c0_i32, %c0_i32_0, %c0_i32_1 : i32, i32, i32
  }
  func.func @transform_4(%arg0: i32, %arg1: i32) -> (i32, i32) {
    %c0_i32 = arith.constant 0 : i32
    %c0_i32_0 = arith.constant 0 : i32
    %c0_i32_1 = arith.constant 0 : i32
    return %c0_i32, %c0_i32_0 : i32, i32
  }
  func.func @transform_5(%arg0: i32, %arg1: i32) -> (i32, i32) {
    %c0_i32 = arith.constant 0 : i32
    %c0_i32_0 = arith.constant 0 : i32
    %c0_i32_1 = arith.constant 0 : i32
    return %c0_i32, %c0_i32_0 : i32, i32
  }
  func.func @transform_6(%arg0: i32, %arg1: i32) -> (i32, i32) {
    %c0_i32 = arith.constant 0 : i32
    %c0_i32_0 = arith.constant 0 : i32
    %c0_i32_1 = arith.constant 0 : i32
    return %c0_i32, %c0_i32_0 : i32, i32
  }
  func.func @transform_7(%arg0: i32, %arg1: i32) -> (i32, i32, i32) {
    %c0_i32 = arith.constant 0 : i32
    %c0_i32_0 = arith.constant 0 : i32
    return %arg0, %arg1, %c0_i32 : i32, i32, i32
  }
}

</mosaic_0001>

<llo_original>
// kernel: tpu_custom_call.1
$region0: #{tpu_custom_call.1}
  #allocation0 [shape = 'u32[]', space=smem, size = 0x4, offset = 0x4, fixed_abs, tag = 'smem constant byte address 0x4 - core index']
  #allocation1 [shape = 'u32[144,128]{1,0:T(1,128)}', space=vmem, size = 0x12000, scoped, tag = 'internal scratch']
  %s0 = inlined_call_operand.hbm [shape: f32[2,16,128], index: 0, kind: input, shape index: {}]
  %s1 = inlined_call_operand.hbm [shape: bf16[3,128,128], index: 1, kind: input, shape index: {}]
  %s2 = inlined_call_operand.vmem [shape: f32[1,128], index: 2, kind: input, shape index: {}]
  %s3 = inlined_call_operand.hbm [shape: bf16[3,128,128], index: 3, kind: input, shape index: {}]
  %s4 = inlined_call_operand.vmem [shape: f32[1,128], index: 4, kind: input, shape index: {}]
  %s5 = inlined_call_operand.hbm [shape: bf16[128,128], index: 5, kind: input, shape index: {}]
  %s6 = inlined_call_operand.vmem [shape: f32[1,128], index: 6, kind: input, shape index: {}]
  %s7 = inlined_call_operand.hbm [shape: f32[2,16,128], index: 7, kind: output, shape index: {}]
  %s8 = sld [smem:[#allocation0]]
  $region77: #{tpu_custom_call.1} parent=0
    _
  %s10 = ssub.s32 1, %s8
  %s11 = scalar_select 0, %s10, %s8
  $region1: #{tpu_custom_call.1} parent=0
    #allocation2 [shape = 'u8[16384]{0}', space=vmem, size = 0x4000, scoped, tag = 'input window, operand 0']
    #allocation3 [shape = 's32[2]{0}', space=sflag, size = 0x8, scoped, tag = 'scoped memory for tpu_custom_call.1']
    #allocation4 [shape = 's32[2]{0}', space=sflag, size = 0x8, scoped, tag = 'scoped memory for tpu_custom_call.1']
    #allocation5 [shape = 'u8[98304]{0}', space=vmem, size = 0x18000, scoped, tag = 'input window, operand 1, single buffered']
    #allocation6 [shape = 's32[1]{0}', space=sflag, size = 0x4, scoped, tag = 'scoped memory for tpu_custom_call.1']
    #allocation7 [shape = 'u8[98304]{0}', space=vmem, size = 0x18000, scoped, tag = 'input window, operand 3, single buffered']
    #allocation8 [shape = 'u8[32768]{0}', space=vmem, size = 0x8000, scoped, tag = 'input window, operand 5, single buffered']
    #allocation9 [shape = 's32[1]{0}', space=sflag, size = 0x4, scoped, tag = 'scoped memory for tpu_custom_call.1']
    #allocation10 [shape = 'u8[16384]{0}', space=vmem, size = 0x4000, scoped, tag = 'output window, operand 0']
    %12 = vsyncpa [#allocation3], 0
    %s13 = scalar_lea.sflag [#allocation3], 1
    %14 = vsyncpa %s13, 0
    %15 = vsyncpa [#allocation6], 0
    %16 = vsyncpa [#allocation9], 0
    %17 = vsyncpa [#allocation4], 0
    %s18 = scalar_lea.sflag [#allocation4], 1
    %19 = vsyncpa %s18, 0
    loop: start=0, step=1, limit=4
    $region2: #{tpu_custom_call.1} parent=1 // loop_pre_header
      _
    $region3: #{tpu_custom_call.1} parent=1 // loop_header
      %s21 = sphi 0, %s25
      %p22 = scmp.ge.s32.totalorder %s21, 4
      %s28 = sphi 0, %s40
      %s29 = sphi 0, %s36
      %s30 = sphi 0, %s28
      %s31 = sphi 0, %s29
      %s32 = sphi 0, %s30
      %s33 = sphi 0, %s31
      %s45 = sphi 0, %s47
      %s48 = sphi 0, %s45
      %s49 = sphi 0, %s48
      %s65 = sphi 0, %s49
      %s69 = sphi 0, %s69
      %s71 = sphi 0, %s69
      %s72 = sphi 0, %s71
      %s86 = sphi 0, %s72
      %s90 = sphi 0, %s90
      %s92 = sphi 0, %s90
      %s93 = sphi 0, %s92
      %s107 = sphi 0, %s93
      %s111 = sphi 0, %s111
      %s113 = sphi 0, %s111
      %s114 = sphi 0, %s113
      %s128 = sphi 0, %s114
      %s132 = sphi 0, %s132
      %s134 = sphi 0, %s132
      %s135 = sphi 0, %s134
      %s149 = sphi 0, %s135
      %s153 = sphi 0, %s153
      %s155 = sphi 0, %s153
      %s156 = sphi 0, %s155
      %s170 = sphi 0, %s156
      %s174 = sphi 0, %s174
      %s176 = sphi 0, %s174
      %s177 = sphi 0, %s176
      %s191 = sphi 0, %s177
      %s199 = sphi 0, %s201
      %s202 = sphi 0, %s199
      %s203 = sphi 0, %s202
      %s219 = sphi 0, %s203
    $region4: #{tpu_custom_call.1} parent=1 // loop_header_branch
      %24 = sbr.rel (%p22) target = $region8
    $region5: #{tpu_custom_call.1} parent=1 // loop_body
      %s26 = ssub.s32 %s21, 1
      %s27 = ssub.s32 %s21, 2
      %s34 = sadd.s32 1, %s29
      %p35 = scmp.ge.s32.totalorder %s34, 1
      %s36 = scalar_select %p35, 0, %s34
      %s37 = sadd.s32 1, %s28
      %s38 = scalar_select %p35, %s37, %s28
      %p39 = scmp.ge.s32.totalorder %s38, 2
      %s40 = scalar_select %p39, 0, %s38
      %s41 = ssub.s32 %s28, %s40
      %s42 = ssub.s32 %s29, %s36
      %s43 = sor.u32 %s41, %s42
      %p44 = scmp.eq.s32.totalorder %s43, 0
      %s46 = sadd.s32 %s45, 1
      %s47 = scalar_select %p44, %s45, %s46
      %p50 = pneg %p44
      %p51 = scmp.eq.s32.totalorder %s21, 1
      %p52 = por %p50, %p51
      %p53 = scmp.ne.s32.totalorder %s45, %s48
      %p54 = scmp.eq.s32.totalorder %s21, 0
      %p55 = por %p53, %p54
      %p56 = scmp.ne.s32.totalorder %s45, %s48
      %p57 = scmp.eq.s32.totalorder %s26, 1
      %p58 = por %p56, %p57
      %p59 = scmp.ne.s32.totalorder %s48, %s49
      %p60 = scmp.eq.s32.totalorder %s26, 0
      %p61 = por %p59, %p60
      %p62 = scmp.ne.s32.totalorder %s48, %s49
      %p63 = scmp.eq.s32.totalorder %s27, 1
      %p64 = por %p62, %p63
      %p66 = scmp.ne.s32.totalorder %s49, %s65
      %p67 = scmp.eq.s32.totalorder %s27, 0
      %p68 = por %p66, %p67
      %s70 = sadd.s32 %s69, 1
      %p73 = scmp.eq.s32.totalorder %s21, 1
      %p74 = scmp.ne.s32.totalorder %s69, %s71
      %p75 = scmp.eq.s32.totalorder %s21, 0
      %p76 = por %p74, %p75
      %p77 = scmp.ne.s32.totalorder %s69, %s71
      %p78 = scmp.eq.s32.totalorder %s26, 1
      %p79 = por %p77, %p78
      %p80 = scmp.ne.s32.totalorder %s71, %s72
      %p81 = scmp.eq.s32.totalorder %s26, 0
      %p82 = por %p80, %p81
      %p83 = scmp.ne.s32.totalorder %s71, %s72
      %p84 = scmp.eq.s32.totalorder %s27, 1
      %p85 = por %p83, %p84
      %p87 = scmp.ne.s32.totalorder %s72, %s86
      %p88 = scmp.eq.s32.totalorder %s27, 0
      %p89 = por %p87, %p88
      %s91 = sadd.s32 %s90, 1
      %p94 = scmp.eq.s32.totalorder %s21, 1
      %p95 = scmp.ne.s32.totalorder %s90, %s92
      %p96 = scmp.eq.s32.totalorder %s21, 0
      %p97 = por %p95, %p96
      %p98 = scmp.ne.s32.totalorder %s90, %s92
      %p99 = scmp.eq.s32.totalorder %s26, 1
      %p100 = por %p98, %p99
      %p101 = scmp.ne.s32.totalorder %s92, %s93
      %p102 = scmp.eq.s32.totalorder %s26, 0
      %p103 = por %p101, %p102
      %p104 = scmp.ne.s32.totalorder %s92, %s93
      %p105 = scmp.eq.s32.totalorder %s27, 1
      %p106 = por %p104, %p105
      %p108 = scmp.ne.s32.totalorder %s93, %s107
      %p109 = scmp.eq.s32.totalorder %s27, 0
      %p110 = por %p108, %p109
      %s112 = sadd.s32 %s111, 1
      %p115 = scmp.eq.s32.totalorder %s21, 1
      %p116 = scmp.ne.s32.totalorder %s111, %s113
      %p117 = scmp.eq.s32.totalorder %s21, 0
      %p118 = por %p116, %p117
      %p119 = scmp.ne.s32.totalorder %s111, %s113
      %p120 = scmp.eq.s32.totalorder %s26, 1
      %p121 = por %p119, %p120
      %p122 = scmp.ne.s32.totalorder %s113, %s114
      %p123 = scmp.eq.s32.totalorder %s26, 0
      %p124 = por %p122, %p123
      %p125 = scmp.ne.s32.totalorder %s113, %s114
      %p126 = scmp.eq.s32.totalorder %s27, 1
      %p127 = por %p125, %p126
      %p129 = scmp.ne.s32.totalorder %s114, %s128
      %p130 = scmp.eq.s32.totalorder %s27, 0
      %p131 = por %p129, %p130
      %s133 = sadd.s32 %s132, 1
      %p136 = scmp.eq.s32.totalorder %s21, 1
      %p137 = scmp.ne.s32.totalorder %s132, %s134
      %p138 = scmp.eq.s32.totalorder %s21, 0
      %p139 = por %p137, %p138
      %p140 = scmp.ne.s32.totalorder %s132, %s134
      %p141 = scmp.eq.s32.totalorder %s26, 1
      %p142 = por %p140, %p141
      %p143 = scmp.ne.s32.totalorder %s134, %s135
      %p144 = scmp.eq.s32.totalorder %s26, 0
      %p145 = por %p143, %p144
      %p146 = scmp.ne.s32.totalorder %s134, %s135
      %p147 = scmp.eq.s32.totalorder %s27, 1
      %p148 = por %p146, %p147
      %p150 = scmp.ne.s32.totalorder %s135, %s149
      %p151 = scmp.eq.s32.totalorder %s27, 0
      %p152 = por %p150, %p151
      %s154 = sadd.s32 %s153, 1
      %p157 = scmp.eq.s32.totalorder %s21, 1
      %p158 = scmp.ne.s32.totalorder %s153, %s155
      %p159 = scmp.eq.s32.totalorder %s21, 0
      %p160 = por %p158, %p159
      %p161 = scmp.ne.s32.totalorder %s153, %s155
      %p162 = scmp.eq.s32.totalorder %s26, 1
      %p163 = por %p161, %p162
      %p164 = scmp.ne.s32.totalorder %s155, %s156
      %p165 = scmp.eq.s32.totalorder %s26, 0
      %p166 = por %p164, %p165
      %p167 = scmp.ne.s32.totalorder %s155, %s156
      %p168 = scmp.eq.s32.totalorder %s27, 1
      %p169 = por %p167, %p168
      %p171 = scmp.ne.s32.totalorder %s156, %s170
      %p172 = scmp.eq.s32.totalorder %s27, 0
      %p173 = por %p171, %p172
      %s175 = sadd.s32 %s174, 1
      %p178 = scmp.eq.s32.totalorder %s21, 1
      %p179 = scmp.ne.s32.totalorder %s174, %s176
      %p180 = scmp.eq.s32.totalorder %s21, 0
      %p181 = por %p179, %p180
      %p182 = scmp.ne.s32.totalorder %s174, %s176
      %p183 = scmp.eq.s32.totalorder %s26, 1
      %p184 = por %p182, %p183
      %p185 = scmp.ne.s32.totalorder %s176, %s177
      %p186 = scmp.eq.s32.totalorder %s26, 0
      %p187 = por %p185, %p186
      %p188 = scmp.ne.s32.totalorder %s176, %s177
      %p189 = scmp.eq.s32.totalorder %s27, 1
      %p190 = por %p188, %p189
      %p192 = scmp.ne.s32.totalorder %s177, %s191
      %p193 = scmp.eq.s32.totalorder %s27, 0
      %p194 = por %p192, %p193
      %s195 = ssub.s32 %s28, %s40
      %s196 = ssub.s32 %s29, %s36
      %s197 = sor.u32 %s195, %s196
      %p198 = scmp.eq.s32.totalorder %s197, 0
      %s200 = sadd.s32 %s199, 1
      %s201 = scalar_select %p198, %s199, %s200
      %p204 = pneg %p198
      %p205 = scmp.eq.s32.totalorder %s21, 1
      %p206 = por %p204, %p205
      %p207 = scmp.ne.s32.totalorder %s199, %s202
      %p208 = scmp.eq.s32.totalorder %s21, 0
      %p209 = por %p207, %p208
      %p210 = scmp.ne.s32.totalorder %s199, %s202
      %p211 = scmp.eq.s32.totalorder %s26, 1
      %p212 = por %p210, %p211
      %p213 = scmp.ne.s32.totalorder %s202, %s203
      %p214 = scmp.eq.s32.totalorder %s26, 0
      %p215 = por %p213, %p214
      %p216 = scmp.ne.s32.totalorder %s202, %s203
      %p217 = scmp.eq.s32.totalorder %s27, 1
      %p218 = por %p216, %p217
      %p220 = scmp.ne.s32.totalorder %s203, %s219
      %p221 = scmp.eq.s32.totalorder %s27, 0
      %p222 = por %p220, %p221
      %p223 = scmp.le.s32.totalorder 1, %s21
      %p224 = scmp.lt.s32.totalorder %s21, 3
      %p225 = pnand %p223, %p224
      %p226 = pneg %p225
      // Predicated region
      $region9: #{tpu_custom_call.1} parent=5 // pred_check
        _
      $region10: #{tpu_custom_call.1} parent=5 // pred_check_branch
        %228 = sbr.rel (%p225) target = $region12
      $region11: #{tpu_custom_call.1} parent=5 // pred_region
        %s229 = ssub.s32 %s21, 1
        // Predicated region
        $region13: #{tpu_custom_call.1} parent=11 // pred_check
          %p230 = pneg %p82
        $region14: #{tpu_custom_call.1} parent=11 // pred_check_branch
          %232 = sbr.rel (%p230) target = $region16
        $region15: #{tpu_custom_call.1} parent=11 // pred_region
          %s234 = ssub.s32 3072, 3072
          %235 = vsyncadd [#allocation6], %s234
          %s236 = sshll.u32 [#allocation5], 4
          %s237 = int_to_ptr.vmem [resolvable:$true] %s236
          %242 = dma.hbm_to_vmem [thread:$0]  %s1, 3072, %s237, [#allocation6], 64, 64, 4
        $region16: #{tpu_custom_call.1} parent=11 // pred_fallthru
          _
        // Predicated region
        $region17: #{tpu_custom_call.1} parent=11 // pred_check
          %p243 = pneg %p103
        $region18: #{tpu_custom_call.1} parent=11 // pred_check_branch
          %245 = sbr.rel (%p243) target = $region20
        $region19: #{tpu_custom_call.1} parent=11 // pred_region
          _
        $region20: #{tpu_custom_call.1} parent=11 // pred_fallthru
          _
        // Predicated region
        $region21: #{tpu_custom_call.1} parent=11 // pred_check
          %p246 = pneg %p124
        $region22: #{tpu_custom_call.1} parent=11 // pred_check_branch
          %248 = sbr.rel (%p246) target = $region24
        $region23: #{tpu_custom_call.1} parent=11 // pred_region
          %s250 = ssub.s32 3072, 3072
          %251 = vsyncadd [#allocation6], %s250
          %s252 = sshll.u32 [#allocation7], 4
          %s253 = int_to_ptr.vmem [resolvable:$true] %s252
          %258 = dma.hbm_to_vmem [thread:$0]  %s3, 3072, %s253, [#allocation6], 64, 64, 4
        $region24: #{tpu_custom_call.1} parent=11 // pred_fallthru
          _
        // Predicated region
        $region25: #{tpu_custom_call.1} parent=11 // pred_check
          %p259 = pneg %p145
        $region26: #{tpu_custom_call.1} parent=11 // pred_check_branch
          %261 = sbr.rel (%p259) target = $region28
        $region27: #{tpu_custom_call.1} parent=11 // pred_region
          _
        $region28: #{tpu_custom_call.1} parent=11 // pred_fallthru
          _
        // Predicated region
        $region29: #{tpu_custom_call.1} parent=11 // pred_check
          %p262 = pneg %p166
        $region30: #{tpu_custom_call.1} parent=11 // pred_check_branch
          %264 = sbr.rel (%p262) target = $region32
        $region31: #{tpu_custom_call.1} parent=11 // pred_region
          %s266 = ssub.s32 1024, 1024
          %267 = vsyncadd [#allocation9], %s266
          %s268 = sshll.u32 [#allocation8], 4
          %s269 = int_to_ptr.vmem [resolvable:$true] %s268
          %274 = dma.hbm_to_vmem [thread:$0]  %s5, 1024, %s269, [#allocation9], 64, 64, 4
        $region32: #{tpu_custom_call.1} parent=11 // pred_fallthru
          _
        // Predicated region
        $region33: #{tpu_custom_call.1} parent=11 // pred_check
          %p275 = pneg %p187
        $region34: #{tpu_custom_call.1} parent=11 // pred_check_branch
          %277 = sbr.rel (%p275) target = $region36
        $region35: #{tpu_custom_call.1} parent=11 // pred_region
          _
        $region36: #{tpu_custom_call.1} parent=11 // pred_fallthru
          _
      $region12: #{tpu_custom_call.1} parent=5 // pred_fallthru
        _
      %p278 = scmp.lt.s32.totalorder %s21, 2
      // Predicated region
      $region37: #{tpu_custom_call.1} parent=5 // pred_check
        %p279 = pneg %p278
      $region38: #{tpu_custom_call.1} parent=5 // pred_check_branch
        %281 = sbr.rel (%p279) target = $region40
      $region39: #{tpu_custom_call.1} parent=5 // pred_region
        // Predicated region
        $region41: #{tpu_custom_call.1} parent=39 // pred_check
          %p282 = pneg %p55
        $region42: #{tpu_custom_call.1} parent=39 // pred_check_branch
          %284 = sbr.rel (%p282) target = $region44
        $region43: #{tpu_custom_call.1} parent=39 // pred_region
          %s285 = sand.u32 %s45, 1
          %s286 = scalar_lea.sflag [#allocation3], %s285
          %s287 = sand.u32 %s45, 1
          %s288 = smul.addr %s287, 16
          %s289 = scalar_lea.vmem [#allocation2], %s288
          %s290 = smul.u32 2, %s29
          %s292 = ssub.s32 256, 256
          %293 = vsyncadd %s286, %s292
          %s294 = smul.addr %s28, 2
          %s295 = sadd.s32 %s290, %s294
          %s296 = smul.addr %s295, 128
          %s297 = scalar_lea.hbm %s0, %s296
          %s298 = sshll.u32 %s289, 4
          %s299 = int_to_ptr.vmem [resolvable:$true] %s298
          %304 = dma.hbm_to_vmem [thread:$0]  %s297, 256, %s299, %s286, 128, 128, 8
        $region44: #{tpu_custom_call.1} parent=39 // pred_fallthru
          _
      $region40: #{tpu_custom_call.1} parent=5 // pred_fallthru
        _
      %p305 = scmp.le.s32.totalorder 1, %s21
      %p306 = scmp.lt.s32.totalorder %s21, 3
      %p307 = pnand %p305, %p306
      %p308 = pneg %p307
      // Predicated region
      $region45: #{tpu_custom_call.1} parent=5 // pred_check
        _
      $region46: #{tpu_custom_call.1} parent=5 // pred_check_branch
        %310 = sbr.rel (%p307) target = $region48
      $region47: #{tpu_custom_call.1} parent=5 // pred_region
        %s311 = ssub.s32 %s21, 1
        %s312 = sand.u32 %s48, 1
        %s313 = scalar_lea.sflag [#allocation3], %s312
        %s314 = sand.u32 %s48, 1
        %s315 = smul.addr %s314, 16
        %s316 = scalar_lea.vmem [#allocation2], %s315
        // Predicated region
        $region49: #{tpu_custom_call.1} parent=47 // pred_check
          %p317 = pneg %p61
        $region50: #{tpu_custom_call.1} parent=47 // pred_check_branch
          %319 = sbr.rel (%p317) target = $region52
        $region51: #{tpu_custom_call.1} parent=47 // pred_region
          %320 = dma.done %s313, 256
        $region52: #{tpu_custom_call.1} parent=47 // pred_fallthru
          _
        // Predicated region
        $region53: #{tpu_custom_call.1} parent=47 // pred_check
          %p321 = pneg %p82
        $region54: #{tpu_custom_call.1} parent=47 // pred_check_branch
          %323 = sbr.rel (%p321) target = $region56
        $region55: #{tpu_custom_call.1} parent=47 // pred_region
          %324 = dma.done [#allocation6], 3072
        $region56: #{tpu_custom_call.1} parent=47 // pred_fallthru
          _
        // Predicated region
        $region57: #{tpu_custom_call.1} parent=47 // pred_check
          %p325 = pneg %p124
        $region58: #{tpu_custom_call.1} parent=47 // pred_check_branch
          %327 = sbr.rel (%p325) target = $region60
        $region59: #{tpu_custom_call.1} parent=47 // pred_region
          %328 = dma.done [#allocation6], 3072
        $region60: #{tpu_custom_call.1} parent=47 // pred_fallthru
          _
        // Predicated region
        $region61: #{tpu_custom_call.1} parent=47 // pred_check
          %p329 = pneg %p166
        $region62: #{tpu_custom_call.1} parent=47 // pred_check_branch
          %331 = sbr.rel (%p329) target = $region64
        $region63: #{tpu_custom_call.1} parent=47 // pred_region
          %332 = dma.done [#allocation9], 1024
        $region64: #{tpu_custom_call.1} parent=47 // pred_fallthru
          _
        %s333 = sand.u32 %s48, 1
        %s334 = scalar_lea.sflag [#allocation3], %s333
        %s335 = sand.u32 %s48, 1
        %s336 = smul.addr %s335, 16
        %s337 = scalar_lea.vmem [#allocation2], %s336
        %p338 = pneg %p61
        %p339 = pneg %p58
        %p340 = pneg %p82
        %p341 = pneg %p79
        %p342 = pneg %p103
        %p343 = pneg %p100
        %p344 = pneg %p124
        %p345 = pneg %p121
        %p346 = pneg %p145
        %p347 = pneg %p142
        %p348 = pneg %p166
        %p349 = pneg %p163
        %p350 = pneg %p187
        %p351 = pneg %p184
        %p352 = pneg %p215
        %p353 = pneg %p212
        %s354 = sand.u32 %s202, 1
        %s355 = scalar_lea.sflag [#allocation4], %s354
        %s356 = sand.u32 %s202, 1
        %s357 = smul.addr %s356, 16
        %s358 = scalar_lea.vmem [#allocation10], %s357
        %s359 = smul.u32 2, %s31
        %s360 = smul.u32 2, %s31
        %v362 = vld [vmem:[%s316] sm:$0xff]
        %v363 = vld [vmem:[%s316 + $0x8] sm:$0xff]
        %v364 = vpack.c.bf16 %v363, %v362
        %v366 = vrot.slane %v364, 4
        %vm368 = vcmask 1043456
        %v371 = vsel %vm368, 0, %v366
        %v373 = vld [vmem:[%s2] sm:$0x1]
        %v374 = vld [vmem:[#allocation5] sm:$0xf]
        %v375 = vld [vmem:[#allocation5 + $0x4] sm:$0xf]
        %v376 = vld [vmem:[#allocation5 + $0x8] sm:$0xf]
        %v377 = vld [vmem:[#allocation5 + $0xc] sm:$0xf]
        %v378 = vld [vmem:[#allocation5 + $0x10] sm:$0xf]
        %v379 = vld [vmem:[#allocation5 + $0x14] sm:$0xf]
        %v380 = vld [vmem:[#allocation5 + $0x18] sm:$0xf]
        %v381 = vld [vmem:[#allocation5 + $0x1c] sm:$0xf]
        %v382 = vld [vmem:[#allocation5 + $0x20] sm:$0xf]
        %v383 = vld [vmem:[#allocation5 + $0x24] sm:$0xf]
        %v384 = vld [vmem:[#allocation5 + $0x28] sm:$0xf]
        %v385 = vld [vmem:[#allocation5 + $0x2c] sm:$0xf]
        %v386 = vld [vmem:[#allocation5 + $0x30] sm:$0xf]
        %v387 = vld [vmem:[#allocation5 + $0x34] sm:$0xf]
        %v388 = vld [vmem:[#allocation5 + $0x38] sm:$0xf]
        %v389 = vld [vmem:[#allocation5 + $0x3c] sm:$0xf]
        %v406 = vunpack.c.l.b16 %v374
        %v407 = vunpack.c.l.b16 %v375
        %v408 = vunpack.c.l.b16 %v376
        %v409 = vunpack.c.l.b16 %v377
        %v410 = vunpack.c.l.b16 %v378
        %v411 = vunpack.c.l.b16 %v379
        %v412 = vunpack.c.l.b16 %v380
        %v413 = vunpack.c.l.b16 %v381
        %v414 = vunpack.c.l.b16 %v382
        %v415 = vunpack.c.l.b16 %v383
        %v416 = vunpack.c.l.b16 %v384
        %v417 = vunpack.c.l.b16 %v385
        %v418 = vunpack.c.l.b16 %v386
        %v419 = vunpack.c.l.b16 %v387
        %v420 = vunpack.c.l.b16 %v388
        %v421 = vunpack.c.l.b16 %v389
        %v422 = vpack.c.b16 %v407, %v406
        %v423 = vpack.c.b16 %v409, %v408
        %v424 = vpack.c.b16 %v411, %v410
        %v425 = vpack.c.b16 %v413, %v412
        %v426 = vpack.c.b16 %v415, %v414
        %v427 = vpack.c.b16 %v417, %v416
        %v428 = vpack.c.b16 %v419, %v418
        %v429 = vpack.c.b16 %v421, %v420
        %438 = vmatprep.subr.bf16.mxu0 0
        %439 = vmatpush1.bf16.msra.mxu0 %v422
        %440 = vmatprep.subr.bf16.mxu0 0
        %441 = vmatpush1.bf16.msra.mxu0 %v423
        %442 = vmatprep.subr.bf16.mxu0 0
        %443 = vmatpush1.bf16.msra.mxu0 %v424
        %444 = vmatprep.subr.bf16.mxu0 0
        %445 = vmatpush1.bf16.msra.mxu0 %v425
        %446 = vmatprep.subr.bf16.mxu0 0
        %447 = vmatpush1.bf16.msra.mxu0 %v426
        %448 = vmatprep.subr.bf16.mxu0 0
        %449 = vmatpush1.bf16.msra.mxu0 %v427
        %450 = vmatprep.subr.bf16.mxu0 0
        %451 = vmatpush1.bf16.msra.mxu0 %v428
        %452 = vmatprep.subr.bf16.mxu0 0
        %453 = vmatpush1.bf16.msra.mxu0 %v429
        %454 = vmatprep.subr.bf16.mxu0 0
        %455 = vmatpush1.bf16.msra.mxu0 0
        %456 = vmatprep.subr.bf16.mxu0 0
        %457 = vmatpush1.bf16.msra.mxu0 0
        %458 = vmatprep.subr.bf16.mxu0 0
        %459 = vmatpush1.bf16.msra.mxu0 0
        %460 = vmatprep.subr.bf16.mxu0 0
        %461 = vmatpush1.bf16.msra.mxu0 0
        %462 = vmatprep.subr.bf16.mxu0 0
        %463 = vmatpush1.bf16.msra.mxu0 0
        %464 = vmatprep.subr.bf16.mxu0 0
        %465 = vmatpush1.bf16.msra.mxu0 0
        %466 = vmatprep.subr.bf16.mxu0 0
        %467 = vmatpush1.bf16.msra.mxu0 0
        %468 = vmatprep.subr.bf16.mxu0 0
        %469 = vmatpush1.bf16.msra.mxu0 0
        %470 = vmatprep.mubr.bf16.mxu0 0
        %471 = vmatmul.mubr.bf16.gmra.mrb[0].mxu0 %v371
        %v472 = vpop.f32.mrb[0].mxu0
        %v473 = vadd.f32 0.0, %v472
        %v474 = vpop.f32.mrb[0].mxu0
        %v475 = vpop.f32.mrb[0].mxu0
        %v476 = vadd.f32 0.0, %v475
        %v477 = vpop.f32.mrb[0].mxu0
        %478 = vmatprep.mubr.bf16.mxu0 0
        %479 = vmatmul.mubr.bf16.gmra.mrb[0].mxu0 %v366
        %v480 = vpop.f32.mrb[0].mxu0
        %v481 = vadd.f32 0.0, %v480
        %v482 = vpop.f32.mrb[0].mxu0
        %v483 = vpop.f32.mrb[0].mxu0
        %v484 = vpop.f32.mrb[0].mxu0
        %485 = vdwg.mxu0
        %v487 = vlaneseq
        %v488 = vshrl.u32 %v487, 7
        %v489 = vsub.s32 0, %v488
        %v490 = vrot.slane %v373, %v489
        %v492 = vadd.f32 %v490, %v473
        %v493 = vadd.f32 %v490, %v476
        %v494 = vadd.f32 %v490, %v481
        %s495 = scalar_lea.vmem [#allocation5], 64
        %v496 = vld [vmem:[%s495] sm:$0xf]
        %v497 = vld [vmem:[%s495 + $0x4] sm:$0xf]
        %v498 = vld [vmem:[%s495 + $0x8] sm:$0xf]
        %v499 = vld [vmem:[%s495 + $0xc] sm:$0xf]
        %v500 = vld [vmem:[%s495 + $0x10] sm:$0xf]
        %v501 = vld [vmem:[%s495 + $0x14] sm:$0xf]
        %v502 = vld [vmem:[%s495 + $0x18] sm:$0xf]
        %v503 = vld [vmem:[%s495 + $0x1c] sm:$0xf]
        %v504 = vld [vmem:[%s495 + $0x20] sm:$0xf]
        %v505 = vld [vmem:[%s495 + $0x24] sm:$0xf]
        %v506 = vld [vmem:[%s495 + $0x28] sm:$0xf]
        %v507 = vld [vmem:[%s495 + $0x2c] sm:$0xf]
        %v508 = vld [vmem:[%s495 + $0x30] sm:$0xf]
        %v509 = vld [vmem:[%s495 + $0x34] sm:$0xf]
        %v510 = vld [vmem:[%s495 + $0x38] sm:$0xf]
        %v511 = vld [vmem:[%s495 + $0x3c] sm:$0xf]
        %vm513 = vcmask 1046528
        %v514 = vrot.slane %v371, 1
        %v515 = vrot.slane %v366, 1
        %v516 = vsel %vm513, %v514, %v515
        %v535 = vunpack.c.l.b16 %v496
        %v536 = vunpack.c.l.b16 %v497
        %v537 = vunpack.c.l.b16 %v498
        %v538 = vunpack.c.l.b16 %v499
        %v539 = vunpack.c.l.b16 %v500
        %v540 = vunpack.c.l.b16 %v501
        %v541 = vunpack.c.l.b16 %v502
        %v542 = vunpack.c.l.b16 %v503
        %v543 = vunpack.c.l.b16 %v504
        %v544 = vunpack.c.l.b16 %v505
        %v545 = vunpack.c.l.b16 %v506
        %v546 = vunpack.c.l.b16 %v507
        %v547 = vunpack.c.l.b16 %v508
        %v548 = vunpack.c.l.b16 %v509
        %v549 = vunpack.c.l.b16 %v510
        %v550 = vunpack.c.l.b16 %v511
        %v551 = vpack.c.b16 %v536, %v535
        %v552 = vpack.c.b16 %v538, %v537
        %v553 = vpack.c.b16 %v540, %v539
        %v554 = vpack.c.b16 %v542, %v541
        %v555 = vpack.c.b16 %v544, %v543
        %v556 = vpack.c.b16 %v546, %v545
        %v557 = vpack.c.b16 %v548, %v547
        %v558 = vpack.c.b16 %v550, %v549
        %567 = vmatprep.subr.bf16.mxu0 0
        %568 = vmatpush1.bf16.msra.mxu0 %v551
        %569 = vmatprep.subr.bf16.mxu0 0
        %570 = vmatpush1.bf16.msra.mxu0 %v552
        %571 = vmatprep.subr.bf16.mxu0 0
        %572 = vmatpush1.bf16.msra.mxu0 %v553
        %573 = vmatprep.subr.bf16.mxu0 0
        %574 = vmatpush1.bf16.msra.mxu0 %v554
        %575 = vmatprep.subr.bf16.mxu0 0
        %576 = vmatpush1.bf16.msra.mxu0 %v555
        %577 = vmatprep.subr.bf16.mxu0 0
        %578 = vmatpush1.bf16.msra.mxu0 %v556
        %579 = vmatprep.subr.bf16.mxu0 0
        %580 = vmatpush1.bf16.msra.mxu0 %v557
        %581 = vmatprep.subr.bf16.mxu0 0
        %582 = vmatpush1.bf16.msra.mxu0 %v558
        %583 = vmatprep.subr.bf16.mxu0 0
        %584 = vmatpush1.bf16.msra.mxu0 0
        %585 = vmatprep.subr.bf16.mxu0 0
        %586 = vmatpush1.bf16.msra.mxu0 0
        %587 = vmatprep.subr.bf16.mxu0 0
        %588 = vmatpush1.bf16.msra.mxu0 0
        %589 = vmatprep.subr.bf16.mxu0 0
        %590 = vmatpush1.bf16.msra.mxu0 0
        %591 = vmatprep.subr.bf16.mxu0 0
        %592 = vmatpush1.bf16.msra.mxu0 0
        %593 = vmatprep.subr.bf16.mxu0 0
        %594 = vmatpush1.bf16.msra.mxu0 0
        %595 = vmatprep.subr.bf16.mxu0 0
        %596 = vmatpush1.bf16.msra.mxu0 0
        %597 = vmatprep.subr.bf16.mxu0 0
        %598 = vmatpush1.bf16.msra.mxu0 0
        %599 = vmatprep.mubr.bf16.mxu0 0
        %600 = vmatmul.mubr.bf16.gmra.mrb[0].mxu0 %v516
        %v601 = vpop.f32.mrb[0].mxu0
        %v602 = vadd.f32 0.0, %v601
        %v603 = vpop.f32.mrb[0].mxu0
        %v604 = vpop.f32.mrb[0].mxu0
        %v605 = vadd.f32 0.0, %v604
        %v606 = vpop.f32.mrb[0].mxu0
        %607 = vmatprep.mubr.bf16.mxu0 0
        %608 = vmatmul.mubr.bf16.gmra.mrb[0].mxu0 %v515
        %v609 = vpop.f32.mrb[0].mxu0
        %v610 = vadd.f32 0.0, %v609
        %v611 = vpop.f32.mrb[0].mxu0
        %v612 = vpop.f32.mrb[0].mxu0
        %v613 = vpop.f32.mrb[0].mxu0
        %614 = vdwg.mxu0
        %v615 = vadd.f32 %v492, %v602
        %v616 = vadd.f32 %v493, %v605
        %v617 = vadd.f32 %v494, %v610
        %s618 = scalar_lea.vmem [#allocation5], 128
        %v619 = vld [vmem:[%s618] sm:$0xf]
        %v620 = vld [vmem:[%s618 + $0x4] sm:$0xf]
        %v621 = vld [vmem:[%s618 + $0x8] sm:$0xf]
        %v622 = vld [vmem:[%s618 + $0xc] sm:$0xf]
        %v623 = vld [vmem:[%s618 + $0x10] sm:$0xf]
        %v624 = vld [vmem:[%s618 + $0x14] sm:$0xf]
        %v625 = vld [vmem:[%s618 + $0x18] sm:$0xf]
        %v626 = vld [vmem:[%s618 + $0x1c] sm:$0xf]
        %v627 = vld [vmem:[%s618 + $0x20] sm:$0xf]
        %v628 = vld [vmem:[%s618 + $0x24] sm:$0xf]
        %v629 = vld [vmem:[%s618 + $0x28] sm:$0xf]
        %v630 = vld [vmem:[%s618 + $0x2c] sm:$0xf]
        %v631 = vld [vmem:[%s618 + $0x30] sm:$0xf]
        %v632 = vld [vmem:[%s618 + $0x34] sm:$0xf]
        %v633 = vld [vmem:[%s618 + $0x38] sm:$0xf]
        %v634 = vld [vmem:[%s618 + $0x3c] sm:$0xf]
        %vm635 = vcmask 1045504
        %v636 = vrot.slane %v371, 2
        %v637 = vrot.slane %v366, 2
        %v638 = vsel %vm635, %v636, %v637
        %v657 = vunpack.c.l.b16 %v619
        %v658 = vunpack.c.l.b16 %v620
        %v659 = vunpack.c.l.b16 %v621
        %v660 = vunpack.c.l.b16 %v622
        %v661 = vunpack.c.l.b16 %v623
        %v662 = vunpack.c.l.b16 %v624
        %v663 = vunpack.c.l.b16 %v625
        %v664 = vunpack.c.l.b16 %v626
        %v665 = vunpack.c.l.b16 %v627
        %v666 = vunpack.c.l.b16 %v628
        %v667 = vunpack.c.l.b16 %v629
        %v668 = vunpack.c.l.b16 %v630
        %v669 = vunpack.c.l.b16 %v631
        %v670 = vunpack.c.l.b16 %v632
        %v671 = vunpack.c.l.b16 %v633
        %v672 = vunpack.c.l.b16 %v634
        %v673 = vpack.c.b16 %v658, %v657
        %v674 = vpack.c.b16 %v660, %v659
        %v675 = vpack.c.b16 %v662, %v661
        %v676 = vpack.c.b16 %v664, %v663
        %v677 = vpack.c.b16 %v666, %v665
        %v678 = vpack.c.b16 %v668, %v667
        %v679 = vpack.c.b16 %v670, %v669
        %v680 = vpack.c.b16 %v672, %v671
        %689 = vmatprep.subr.bf16.mxu0 0
        %690 = vmatpush1.bf16.msra.mxu0 %v673
        %691 = vmatprep.subr.bf16.mxu0 0
        %692 = vmatpush1.bf16.msra.mxu0 %v674
        %693 = vmatprep.subr.bf16.mxu0 0
        %694 = vmatpush1.bf16.msra.mxu0 %v675
        %695 = vmatprep.subr.bf16.mxu0 0
        %696 = vmatpush1.bf16.msra.mxu0 %v676
        %697 = vmatprep.subr.bf16.mxu0 0
        %698 = vmatpush1.bf16.msra.mxu0 %v677
        %699 = vmatprep.subr.bf16.mxu0 0
        %700 = vmatpush1.bf16.msra.mxu0 %v678
        %701 = vmatprep.subr.bf16.mxu0 0
        %702 = vmatpush1.bf16.msra.mxu0 %v679
        %703 = vmatprep.subr.bf16.mxu0 0
        %704 = vmatpush1.bf16.msra.mxu0 %v680
        %705 = vmatprep.subr.bf16.mxu0 0
        %706 = vmatpush1.bf16.msra.mxu0 0
        %707 = vmatprep.subr.bf16.mxu0 0
        %708 = vmatpush1.bf16.msra.mxu0 0
        %709 = vmatprep.subr.bf16.mxu0 0
        %710 = vmatpush1.bf16.msra.mxu0 0
        %711 = vmatprep.subr.bf16.mxu0 0
        %712 = vmatpush1.bf16.msra.mxu0 0
        %713 = vmatprep.subr.bf16.mxu0 0
        %714 = vmatpush1.bf16.msra.mxu0 0
        %715 = vmatprep.subr.bf16.mxu0 0
        %716 = vmatpush1.bf16.msra.mxu0 0
        %717 = vmatprep.subr.bf16.mxu0 0
        %718 = vmatpush1.bf16.msra.mxu0 0
        %719 = vmatprep.subr.bf16.mxu0 0
        %720 = vmatpush1.bf16.msra.mxu0 0
        %721 = vmatprep.mubr.bf16.mxu0 0
        %722 = vmatmul.mubr.bf16.gmra.mrb[0].mxu0 %v638
        %v723 = vpop.f32.mrb[0].mxu0
        %v724 = vadd.f32 0.0, %v723
        %v725 = vpop.f32.mrb[0].mxu0
        %v726 = vpop.f32.mrb[0].mxu0
        %v727 = vadd.f32 0.0, %v726
        %v728 = vpop.f32.mrb[0].mxu0
        %729 = vmatprep.mubr.bf16.mxu0 0
        %730 = vmatmul.mubr.bf16.gmra.mrb[0].mxu0 %v637
        %v731 = vpop.f32.mrb[0].mxu0
        %v732 = vadd.f32 0.0, %v731
        %v733 = vpop.f32.mrb[0].mxu0
        %v734 = vpop.f32.mrb[0].mxu0
        %v735 = vpop.f32.mrb[0].mxu0
        %736 = vdwg.mxu0
        %v737 = vadd.f32 %v615, %v724
        %v738 = vadd.f32 %v616, %v727
        %v739 = vadd.f32 %v617, %v732
        %v740 = vmax.f32 %v737, 0.0
        %v741 = vmax.f32 %v738, 0.0
        %v742 = vmax.f32 %v739, 0.0
        %s743 = smul.u32 %s31, 16
        %s744 = ssub.s32 %s743, 4
        %v745 = vlaneseq
        %v746 = vshrl.u32 %v745, 7
        %v747 = vadd.s32 %v746, 8
        %v748 = vadd.s32 %v746, 16
        %v749 = vstv %s744
        %v750 = vadd.s32 %v749, %v746
        %v751 = vadd.s32 %v749, %v747
        %v752 = vadd.s32 %v749, %v748
        %vm753 = vcmp.ge.s32.totalorder %v750, 0
        %vm754 = vcmp.ge.s32.totalorder %v751, 0
        %vm755 = vcmp.ge.s32.totalorder %v752, 0
        %v756 = vsel %vm753, 1, 0
        %v757 = vsel %vm754, 1, 0
        %v758 = vsel %vm755, 1, 0
        %vm759 = vcmp.eq.s32.totalorder %v756, 1
        %vm760 = vcmp.eq.s32.totalorder %v757, 1
        %vm761 = vcmp.eq.s32.totalorder %v758, 1
        %v762 = vsel %vm759, %v740, 0.0
        %v763 = vsel %vm760, %v741, 0.0
        %v764 = vsel %vm761, %v742, 0.0
        %v765 = vpack.c.bf16 %v763, %v762
        %v766 = vpack.c.bf16 %v764, %v764
        %v767 = vld [vmem:[%s4] sm:$0x1]
        %v768 = vld [vmem:[#allocation7] sm:$0xf]
        %v769 = vld [vmem:[#allocation7 + $0x4] sm:$0xf]
        %v770 = vld [vmem:[#allocation7 + $0x8] sm:$0xf]
        %v771 = vld [vmem:[#allocation7 + $0xc] sm:$0xf]
        %v772 = vld [vmem:[#allocation7 + $0x10] sm:$0xf]
        %v773 = vld [vmem:[#allocation7 + $0x14] sm:$0xf]
        %v774 = vld [vmem:[#allocation7 + $0x18] sm:$0xf]
        %v775 = vld [vmem:[#allocation7 + $0x1c] sm:$0xf]
        %v776 = vld [vmem:[#allocation7 + $0x20] sm:$0xf]
        %v777 = vld [vmem:[#allocation7 + $0x24] sm:$0xf]
        %v778 = vld [vmem:[#allocation7 + $0x28] sm:$0xf]
        %v779 = vld [vmem:[#allocation7 + $0x2c] sm:$0xf]
        %v780 = vld [vmem:[#allocation7 + $0x30] sm:$0xf]
        %v781 = vld [vmem:[#allocation7 + $0x34] sm:$0xf]
        %v782 = vld [vmem:[#allocation7 + $0x38] sm:$0xf]
        %v783 = vld [vmem:[#allocation7 + $0x3c] sm:$0xf]
        %v800 = vunpack.c.l.b16 %v768
        %v801 = vunpack.c.l.b16 %v769
        %v802 = vunpack.c.l.b16 %v770
        %v803 = vunpack.c.l.b16 %v771
        %v804 = vunpack.c.l.b16 %v772
        %v805 = vunpack.c.l.b16 %v773
        %v806 = vunpack.c.l.b16 %v774
        %v807 = vunpack.c.l.b16 %v775
        %v808 = vunpack.c.l.b16 %v776
        %v809 = vunpack.c.l.b16 %v777
        %v810 = vunpack.c.l.b16 %v778
        %v811 = vunpack.c.l.b16 %v779
        %v812 = vunpack.c.l.b16 %v780
        %v813 = vunpack.c.l.b16 %v781
        %v814 = vunpack.c.l.b16 %v782
        %v815 = vunpack.c.l.b16 %v783
        %v816 = vpack.c.b16 %v801, %v800
        %v817 = vpack.c.b16 %v803, %v802
        %v818 = vpack.c.b16 %v805, %v804
        %v819 = vpack.c.b16 %v807, %v806
        %v820 = vpack.c.b16 %v809, %v808
        %v821 = vpack.c.b16 %v811, %v810
        %v822 = vpack.c.b16 %v813, %v812
        %v823 = vpack.c.b16 %v815, %v814
        %832 = vmatprep.subr.bf16.mxu0 0
        %833 = vmatpush1.bf16.msra.mxu0 %v816
        %834 = vmatprep.subr.bf16.mxu0 0
        %835 = vmatpush1.bf16.msra.mxu0 %v817
        %836 = vmatprep.subr.bf16.mxu0 0
        %837 = vmatpush1.bf16.msra.mxu0 %v818
        %838 = vmatprep.subr.bf16.mxu0 0
        %839 = vmatpush1.bf16.msra.mxu0 %v819
        %840 = vmatprep.subr.bf16.mxu0 0
        %841 = vmatpush1.bf16.msra.mxu0 %v820
        %842 = vmatprep.subr.bf16.mxu0 0
        %843 = vmatpush1.bf16.msra.mxu0 %v821
        %844 = vmatprep.subr.bf16.mxu0 0
        %845 = vmatpush1.bf16.msra.mxu0 %v822
        %846 = vmatprep.subr.bf16.mxu0 0
        %847 = vmatpush1.bf16.msra.mxu0 %v823
        %848 = vmatprep.subr.bf16.mxu0 0
        %849 = vmatpush1.bf16.msra.mxu0 0
        %850 = vmatprep.subr.bf16.mxu0 0
        %851 = vmatpush1.bf16.msra.mxu0 0
        %852 = vmatprep.subr.bf16.mxu0 0
        %853 = vmatpush1.bf16.msra.mxu0 0
        %854 = vmatprep.subr.bf16.mxu0 0
        %855 = vmatpush1.bf16.msra.mxu0 0
        %856 = vmatprep.subr.bf16.mxu0 0
        %857 = vmatpush1.bf16.msra.mxu0 0
        %858 = vmatprep.subr.bf16.mxu0 0
        %859 = vmatpush1.bf16.msra.mxu0 0
        %860 = vmatprep.subr.bf16.mxu0 0
        %861 = vmatpush1.bf16.msra.mxu0 0
        %862 = vmatprep.subr.bf16.mxu0 0
        %863 = vmatpush1.bf16.msra.mxu0 0
        %864 = vmatprep.mubr.bf16.mxu0 0
        %865 = vmatmul.mubr.bf16.gmra.mrb[0].mxu0 %v765
        %v866 = vpop.f32.mrb[0].mxu0
        %v867 = vadd.f32 0.0, %v866
        %v868 = vpop.f32.mrb[0].mxu0
        %v869 = vpop.f32.mrb[0].mxu0
        %v870 = vadd.f32 0.0, %v869
        %v871 = vpop.f32.mrb[0].mxu0
        %872 = vdwg.mxu0
        %v874 = vlaneseq
        %v875 = vshrl.u32 %v874, 7
        %v876 = vsub.s32 0, %v875
        %v877 = vrot.slane %v767, %v876
        %v879 = vadd.f32 %v877, %v867
        %v880 = vadd.f32 %v877, %v870
        %s881 = scalar_lea.vmem [#allocation7], 64
        %v882 = vld [vmem:[%s881] sm:$0xf]
        %v883 = vld [vmem:[%s881 + $0x4] sm:$0xf]
        %v884 = vld [vmem:[%s881 + $0x8] sm:$0xf]
        %v885 = vld [vmem:[%s881 + $0xc] sm:$0xf]
        %v886 = vld [vmem:[%s881 + $0x10] sm:$0xf]
        %v887 = vld [vmem:[%s881 + $0x14] sm:$0xf]
        %v888 = vld [vmem:[%s881 + $0x18] sm:$0xf]
        %v889 = vld [vmem:[%s881 + $0x1c] sm:$0xf]
        %v890 = vld [vmem:[%s881 + $0x20] sm:$0xf]
        %v891 = vld [vmem:[%s881 + $0x24] sm:$0xf]
        %v892 = vld [vmem:[%s881 + $0x28] sm:$0xf]
        %v893 = vld [vmem:[%s881 + $0x2c] sm:$0xf]
        %v894 = vld [vmem:[%s881 + $0x30] sm:$0xf]
        %v895 = vld [vmem:[%s881 + $0x34] sm:$0xf]
        %v896 = vld [vmem:[%s881 + $0x38] sm:$0xf]
        %v897 = vld [vmem:[%s881 + $0x3c] sm:$0xf]
        %v900 = vrot.slane %v765, 1
        %v901 = vrot.slane %v766, 1
        %v902 = vsel %vm513, %v900, %v901
        %v920 = vunpack.c.l.b16 %v882
        %v921 = vunpack.c.l.b16 %v883
        %v922 = vunpack.c.l.b16 %v884
        %v923 = vunpack.c.l.b16 %v885
        %v924 = vunpack.c.l.b16 %v886
        %v925 = vunpack.c.l.b16 %v887
        %v926 = vunpack.c.l.b16 %v888
        %v927 = vunpack.c.l.b16 %v889
        %v928 = vunpack.c.l.b16 %v890
        %v929 = vunpack.c.l.b16 %v891
        %v930 = vunpack.c.l.b16 %v892
        %v931 = vunpack.c.l.b16 %v893
        %v932 = vunpack.c.l.b16 %v894
        %v933 = vunpack.c.l.b16 %v895
        %v934 = vunpack.c.l.b16 %v896
        %v935 = vunpack.c.l.b16 %v897
        %v936 = vpack.c.b16 %v921, %v920
        %v937 = vpack.c.b16 %v923, %v922
        %v938 = vpack.c.b16 %v925, %v924
        %v939 = vpack.c.b16 %v927, %v926
        %v940 = vpack.c.b16 %v929, %v928
        %v941 = vpack.c.b16 %v931, %v930
        %v942 = vpack.c.b16 %v933, %v932
        %v943 = vpack.c.b16 %v935, %v934
        %952 = vmatprep.subr.bf16.mxu0 0
        %953 = vmatpush1.bf16.msra.mxu0 %v936
        %954 = vmatprep.subr.bf16.mxu0 0
        %955 = vmatpush1.bf16.msra.mxu0 %v937
        %956 = vmatprep.subr.bf16.mxu0 0
        %957 = vmatpush1.bf16.msra.mxu0 %v938
        %958 = vmatprep.subr.bf16.mxu0 0
        %959 = vmatpush1.bf16.msra.mxu0 %v939
        %960 = vmatprep.subr.bf16.mxu0 0
        %961 = vmatpush1.bf16.msra.mxu0 %v940
        %962 = vmatprep.subr.bf16.mxu0 0
        %963 = vmatpush1.bf16.msra.mxu0 %v941
        %964 = vmatprep.subr.bf16.mxu0 0
        %965 = vmatpush1.bf16.msra.mxu0 %v942
        %966 = vmatprep.subr.bf16.mxu0 0
        %967 = vmatpush1.bf16.msra.mxu0 %v943
        %968 = vmatprep.subr.bf16.mxu0 0
        %969 = vmatpush1.bf16.msra.mxu0 0
        %970 = vmatprep.subr.bf16.mxu0 0
        %971 = vmatpush1.bf16.msra.mxu0 0
        %972 = vmatprep.subr.bf16.mxu0 0
        %973 = vmatpush1.bf16.msra.mxu0 0
        %974 = vmatprep.subr.bf16.mxu0 0
        %975 = vmatpush1.bf16.msra.mxu0 0
        %976 = vmatprep.subr.bf16.mxu0 0
        %977 = vmatpush1.bf16.msra.mxu0 0
        %978 = vmatprep.subr.bf16.mxu0 0
        %979 = vmatpush1.bf16.msra.mxu0 0
        %980 = vmatprep.subr.bf16.mxu0 0
        %981 = vmatpush1.bf16.msra.mxu0 0
        %982 = vmatprep.subr.bf16.mxu0 0
        %983 = vmatpush1.bf16.msra.mxu0 0
        %984 = vmatprep.mubr.bf16.mxu0 0
        %985 = vmatmul.mubr.bf16.gmra.mrb[0].mxu0 %v902
        %v986 = vpop.f32.mrb[0].mxu0
        %v987 = vadd.f32 0.0, %v986
        %v988 = vpop.f32.mrb[0].mxu0
        %v989 = vpop.f32.mrb[0].mxu0
        %v990 = vadd.f32 0.0, %v989
        %v991 = vpop.f32.mrb[0].mxu0
        %992 = vdwg.mxu0
        %v993 = vadd.f32 %v879, %v987
        %v994 = vadd.f32 %v880, %v990
        %s995 = scalar_lea.vmem [#allocation7], 128
        %v996 = vld [vmem:[%s995] sm:$0xf]
        %v997 = vld [vmem:[%s995 + $0x4] sm:$0xf]
        %v998 = vld [vmem:[%s995 + $0x8] sm:$0xf]
        %v999 = vld [vmem:[%s995 + $0xc] sm:$0xf]
        %v1000 = vld [vmem:[%s995 + $0x10] sm:$0xf]
        %v1001 = vld [vmem:[%s995 + $0x14] sm:$0xf]
        %v1002 = vld [vmem:[%s995 + $0x18] sm:$0xf]
        %v1003 = vld [vmem:[%s995 + $0x1c] sm:$0xf]
        %v1004 = vld [vmem:[%s995 + $0x20] sm:$0xf]
        %v1005 = vld [vmem:[%s995 + $0x24] sm:$0xf]
        %v1006 = vld [vmem:[%s995 + $0x28] sm:$0xf]
        %v1007 = vld [vmem:[%s995 + $0x2c] sm:$0xf]
        %v1008 = vld [vmem:[%s995 + $0x30] sm:$0xf]
        %v1009 = vld [vmem:[%s995 + $0x34] sm:$0xf]
        %v1010 = vld [vmem:[%s995 + $0x38] sm:$0xf]
        %v1011 = vld [vmem:[%s995 + $0x3c] sm:$0xf]
        %v1012 = vrot.slane %v765, 2
        %v1013 = vrot.slane %v766, 2
        %v1014 = vsel %vm635, %v1012, %v1013
        %v1032 = vunpack.c.l.b16 %v996
        %v1033 = vunpack.c.l.b16 %v997
        %v1034 = vunpack.c.l.b16 %v998
        %v1035 = vunpack.c.l.b16 %v999
        %v1036 = vunpack.c.l.b16 %v1000
        %v1037 = vunpack.c.l.b16 %v1001
        %v1038 = vunpack.c.l.b16 %v1002
        %v1039 = vunpack.c.l.b16 %v1003
        %v1040 = vunpack.c.l.b16 %v1004
        %v1041 = vunpack.c.l.b16 %v1005
        %v1042 = vunpack.c.l.b16 %v1006
        %v1043 = vunpack.c.l.b16 %v1007
        %v1044 = vunpack.c.l.b16 %v1008
        %v1045 = vunpack.c.l.b16 %v1009
        %v1046 = vunpack.c.l.b16 %v1010
        %v1047 = vunpack.c.l.b16 %v1011
        %v1048 = vpack.c.b16 %v1033, %v1032
        %v1049 = vpack.c.b16 %v1035, %v1034
        %v1050 = vpack.c.b16 %v1037, %v1036
        %v1051 = vpack.c.b16 %v1039, %v1038
        %v1052 = vpack.c.b16 %v1041, %v1040
        %v1053 = vpack.c.b16 %v1043, %v1042
        %v1054 = vpack.c.b16 %v1045, %v1044
        %v1055 = vpack.c.b16 %v1047, %v1046
        %1064 = vmatprep.subr.bf16.mxu0 0
        %1065 = vmatpush1.bf16.msra.mxu0 %v1048
        %1066 = vmatprep.subr.bf16.mxu0 0
        %1067 = vmatpush1.bf16.msra.mxu0 %v1049
        %1068 = vmatprep.subr.bf16.mxu0 0
        %1069 = vmatpush1.bf16.msra.mxu0 %v1050
        %1070 = vmatprep.subr.bf16.mxu0 0
        %1071 = vmatpush1.bf16.msra.mxu0 %v1051
        %1072 = vmatprep.subr.bf16.mxu0 0
        %1073 = vmatpush1.bf16.msra.mxu0 %v1052
        %1074 = vmatprep.subr.bf16.mxu0 0
        %1075 = vmatpush1.bf16.msra.mxu0 %v1053
        %1076 = vmatprep.subr.bf16.mxu0 0
        %1077 = vmatpush1.bf16.msra.mxu0 %v1054
        %1078 = vmatprep.subr.bf16.mxu0 0
        %1079 = vmatpush1.bf16.msra.mxu0 %v1055
        %1080 = vmatprep.subr.bf16.mxu0 0
        %1081 = vmatpush1.bf16.msra.mxu0 0
        %1082 = vmatprep.subr.bf16.mxu0 0
        %1083 = vmatpush1.bf16.msra.mxu0 0
        %1084 = vmatprep.subr.bf16.mxu0 0
        %1085 = vmatpush1.bf16.msra.mxu0 0
        %1086 = vmatprep.subr.bf16.mxu0 0
        %1087 = vmatpush1.bf16.msra.mxu0 0
        %1088 = vmatprep.subr.bf16.mxu0 0
        %1089 = vmatpush1.bf16.msra.mxu0 0
        %1090 = vmatprep.subr.bf16.mxu0 0
        %1091 = vmatpush1.bf16.msra.mxu0 0
        %1092 = vmatprep.subr.bf16.mxu0 0
        %1093 = vmatpush1.bf16.msra.mxu0 0
        %1094 = vmatprep.subr.bf16.mxu0 0
        %1095 = vmatpush1.bf16.msra.mxu0 0
        %1096 = vmatprep.mubr.bf16.mxu0 0
        %1097 = vmatmul.mubr.bf16.gmra.mrb[0].mxu0 %v1014
        %v1098 = vpop.f32.mrb[0].mxu0
        %v1099 = vadd.f32 0.0, %v1098
        %v1100 = vpop.f32.mrb[0].mxu0
        %v1101 = vpop.f32.mrb[0].mxu0
        %v1102 = vadd.f32 0.0, %v1101
        %v1103 = vpop.f32.mrb[0].mxu0
        %1104 = vdwg.mxu0
        %v1105 = vadd.f32 %v993, %v1099
        %v1106 = vadd.f32 %v994, %v1102
        %v1107 = vmax.f32 %v1105, 0.0
        %v1108 = vmax.f32 %v1106, 0.0
        %v1109 = vld [vmem:[#allocation8] sm:$0xf]
        %v1110 = vld [vmem:[#allocation8 + $0x4] sm:$0xf]
        %v1111 = vld [vmem:[#allocation8 + $0x8] sm:$0xf]
        %v1112 = vld [vmem:[#allocation8 + $0xc] sm:$0xf]
        %v1113 = vld [vmem:[#allocation8 + $0x10] sm:$0xf]
        %v1114 = vld [vmem:[#allocation8 + $0x14] sm:$0xf]
        %v1115 = vld [vmem:[#allocation8 + $0x18] sm:$0xf]
        %v1116 = vld [vmem:[#allocation8 + $0x1c] sm:$0xf]
        %v1117 = vld [vmem:[#allocation8 + $0x20] sm:$0xf]
        %v1118 = vld [vmem:[#allocation8 + $0x24] sm:$0xf]
        %v1119 = vld [vmem:[#allocation8 + $0x28] sm:$0xf]
        %v1120 = vld [vmem:[#allocation8 + $0x2c] sm:$0xf]
        %v1121 = vld [vmem:[#allocation8 + $0x30] sm:$0xf]
        %v1122 = vld [vmem:[#allocation8 + $0x34] sm:$0xf]
        %v1123 = vld [vmem:[#allocation8 + $0x38] sm:$0xf]
        %v1124 = vld [vmem:[#allocation8 + $0x3c] sm:$0xf]
        %v1125 = vld [vmem:[%s6] sm:$0x1]
        %v1127 = vlaneseq
        %v1128 = vshrl.u32 %v1127, 7
        %v1129 = vsub.s32 0, %v1128
        %v1130 = vrot.slane %v1125, %v1129
        %v1148 = vunpack.c.l.b16 %v1109
        %v1149 = vunpack.c.l.b16 %v1110
        %v1150 = vunpack.c.l.b16 %v1111
        %v1151 = vunpack.c.l.b16 %v1112
        %v1152 = vunpack.c.l.b16 %v1113
        %v1153 = vunpack.c.l.b16 %v1114
        %v1154 = vunpack.c.l.b16 %v1115
        %v1155 = vunpack.c.l.b16 %v1116
        %v1156 = vunpack.c.l.b16 %v1117
        %v1157 = vunpack.c.l.b16 %v1118
        %v1158 = vunpack.c.l.b16 %v1119
        %v1159 = vunpack.c.l.b16 %v1120
        %v1160 = vunpack.c.l.b16 %v1121
        %v1161 = vunpack.c.l.b16 %v1122
        %v1162 = vunpack.c.l.b16 %v1123
        %v1163 = vunpack.c.l.b16 %v1124
        %v1164 = vpack.c.b16 %v1149, %v1148
        %v1165 = vpack.c.b16 %v1151, %v1150
        %v1166 = vpack.c.b16 %v1153, %v1152
        %v1167 = vpack.c.b16 %v1155, %v1154
        %v1168 = vpack.c.b16 %v1157, %v1156
        %v1169 = vpack.c.b16 %v1159, %v1158
        %v1170 = vpack.c.b16 %v1161, %v1160
        %v1171 = vpack.c.b16 %v1163, %v1162
        %1180 = vmatprep.subr.bf16.mxu0 0
        %1181 = vmatpush1.bf16.msra.mxu0 %v1164
        %1182 = vmatprep.subr.bf16.mxu0 0
        %1183 = vmatpush1.bf16.msra.mxu0 %v1165
        %1184 = vmatprep.subr.bf16.mxu0 0
        %1185 = vmatpush1.bf16.msra.mxu0 %v1166
        %1186 = vmatprep.subr.bf16.mxu0 0
        %1187 = vmatpush1.bf16.msra.mxu0 %v1167
        %1188 = vmatprep.subr.bf16.mxu0 0
        %1189 = vmatpush1.bf16.msra.mxu0 %v1168
        %1190 = vmatprep.subr.bf16.mxu0 0
        %1191 = vmatpush1.bf16.msra.mxu0 %v1169
        %1192 = vmatprep.subr.bf16.mxu0 0
        %1193 = vmatpush1.bf16.msra.mxu0 %v1170
        %1194 = vmatprep.subr.bf16.mxu0 0
        %1195 = vmatpush1.bf16.msra.mxu0 %v1171
        %1196 = vmatprep.subr.bf16.mxu0 0
        %1197 = vmatpush1.bf16.msra.mxu0 0
        %1198 = vmatprep.subr.bf16.mxu0 0
        %1199 = vmatpush1.bf16.msra.mxu0 0
        %1200 = vmatprep.subr.bf16.mxu0 0
        %1201 = vmatpush1.bf16.msra.mxu0 0
        %1202 = vmatprep.subr.bf16.mxu0 0
        %1203 = vmatpush1.bf16.msra.mxu0 0
        %1204 = vmatprep.subr.bf16.mxu0 0
        %1205 = vmatpush1.bf16.msra.mxu0 0
        %1206 = vmatprep.subr.bf16.mxu0 0
        %1207 = vmatpush1.bf16.msra.mxu0 0
        %1208 = vmatprep.subr.bf16.mxu0 0
        %1209 = vmatpush1.bf16.msra.mxu0 0
        %1210 = vmatprep.subr.bf16.mxu0 0
        %1211 = vmatpush1.bf16.msra.mxu0 0
        %1212 = vmatprep.mubr.bf16.mxu0 0
        %1213 = vmatmul.mubr.bf16.gmra.mrb[0].mxu0 %v364
        %v1214 = vpop.f32.mrb[0].mxu0
        %v1215 = vadd.f32 %v1130, %v1214
        %v1216 = vpop.f32.mrb[0].mxu0
        %v1217 = vpop.f32.mrb[0].mxu0
        %v1218 = vadd.f32 %v1130, %v1217
        %v1219 = vpop.f32.mrb[0].mxu0
        %1220 = vdwg.mxu0
        %v1221 = vadd.f32 %v1107, %v1215
        %v1222 = vadd.f32 %v1108, %v1218
        %v1223 = vmax.f32 %v1221, 0.0
        %v1224 = vmax.f32 %v1222, 0.0
        %1225 = vst [vmem:[%s358] sm:$0xff] %v1223
        %1226 = vst [vmem:[%s358 + $0x8] sm:$0xff] %v1224
        %s1227 = sand.u32 %s202, 1
        %s1228 = scalar_lea.sflag [#allocation4], %s1227
        %s1229 = sand.u32 %s202, 1
        %s1230 = smul.addr %s1229, 16
        %s1231 = scalar_lea.vmem [#allocation10], %s1230
        // Predicated region
        $region65: #{tpu_custom_call.1} parent=47 // pred_check
          %p1232 = pneg %p212
        $region66: #{tpu_custom_call.1} parent=47 // pred_check_branch
          %1234 = sbr.rel (%p1232) target = $region68
        $region67: #{tpu_custom_call.1} parent=47 // pred_region
          %s1235 = smul.u32 2, %s31
          %s1237 = ssub.s32 256, 256
          %1238 = vsyncadd %s1228, %s1237
          %s1239 = smul.addr %s30, 2
          %s1240 = sadd.s32 %s1235, %s1239
          %s1241 = smul.addr %s1240, 128
          %s1242 = scalar_lea.hbm %s7, %s1241
          %s1243 = sshll.u32 %s1231, 4
          %s1244 = int_to_ptr.vmem [resolvable:$true] %s1243
          %1249 = dma.vmem_to_hbm [thread:$0]  %s1244, 256, %s1242, %s1228, 128, 128, 8
        $region68: #{tpu_custom_call.1} parent=47 // pred_fallthru
          _
      $region48: #{tpu_custom_call.1} parent=5 // pred_fallthru
        _
      %p1250 = scmp.le.s32.totalorder 2, %s21
      // Predicated region
      $region69: #{tpu_custom_call.1} parent=5 // pred_check
        %p1251 = pneg %p1250
      $region70: #{tpu_custom_call.1} parent=5 // pred_check_branch
        %1253 = sbr.rel (%p1251) target = $region72
      $region71: #{tpu_custom_call.1} parent=5 // pred_region
        %s1254 = ssub.s32 %s21, 2
        // Predicated region
        $region73: #{tpu_custom_call.1} parent=71 // pred_check
          %p1255 = pneg %p218
        $region74: #{tpu_custom_call.1} parent=71 // pred_check_branch
          %1257 = sbr.rel (%p1255) target = $region76
        $region75: #{tpu_custom_call.1} parent=71 // pred_region
          %s1258 = sand.u32 %s203, 1
          %s1259 = scalar_lea.sflag [#allocation4], %s1258
          %s1260 = sand.u32 %s203, 1
          %s1261 = smul.addr %s1260, 16
          %s1262 = scalar_lea.vmem [#allocation10], %s1261
          %1263 = dma.done %s1259, 256
        $region76: #{tpu_custom_call.1} parent=71 // pred_fallthru
          _
      $region72: #{tpu_custom_call.1} parent=5 // pred_fallthru
        _
    $region6: #{tpu_custom_call.1} parent=1 // loop_footer
      %s25 = sadd.s32 1, %s21
    $region7: #{tpu_custom_call.1} parent=1 // loop_footer_branch
      %20 = sbr.rel target = $region3
    $region8: #{tpu_custom_call.1} parent=1 // loop_exit
      _
    %1264 = vsyncpa [#allocation3], 1
    %s1265 = scalar_lea.sflag [#allocation3], 1
    %1266 = vsyncpa %s1265, 1
    %1267 = vsyncpa [#allocation6], 1
    %1268 = vsyncpa [#allocation9], 1
    %1269 = vsyncpa [#allocation4], 1
    %s1270 = scalar_lea.sflag [#allocation4], 1
    %1271 = vsyncpa %s1270, 1

// kernel: tpu_custom_call.1
$region0: #{tpu_custom_call.1}
  #allocation0 [shape = 'u32[]', space=smem, size = 0x4, offset = 0x4, fixed_abs, tag = 'smem constant byte address 0x4 - core index']
  #allocation1 [shape = 'u32[144,128]{1,0:T(1,128)}', space=vmem, size = 0x12000, scoped, tag = 'internal scratch']
  %s0 = inlined_call_operand.hbm [shape: f32[2,16,128], index: 0, kind: input, shape index: {}]
  %s1 = inlined_call_operand.hbm [shape: bf16[3,128,128], index: 1, kind: input, shape index: {}]
  %s2 = inlined_call_operand.vmem [shape: f32[1,128], index: 2, kind: input, shape index: {}]
  %s3 = inlined_call_operand.hbm [shape: bf16[3,128,128], index: 3, kind: input, shape index: {}]
  %s4 = inlined_call_operand.vmem [shape: f32[1,128], index: 4, kind: input, shape index: {}]
  %s5 = inlined_call_operand.hbm [shape: bf16[128,128], index: 5, kind: input, shape index: {}]
  %s6 = inlined_call_operand.vmem [shape: f32[1,128], index: 6, kind: input, shape index: {}]
  %s7 = inlined_call_operand.hbm [shape: f32[2,16,128], index: 7, kind: output, shape index: {}]
  %s8 = sld [smem:[#allocation0]]
  $region77: #{tpu_custom_call.1} parent=0
    _
  %s10 = ssub.s32 1, %s8
  %s11 = scalar_select 0, %s10, %s8
  $region1: #{tpu_custom_call.1} parent=0
    #allocation2 [shape = 'u8[16384]{0}', space=vmem, size = 0x4000, scoped, tag = 'input window, operand 0']
    #allocation3 [shape = 's32[2]{0}', space=sflag, size = 0x8, scoped, tag = 'scoped memory for tpu_custom_call.1']
    #allocation4 [shape = 's32[2]{0}', space=sflag, size = 0x8, scoped, tag = 'scoped memory for tpu_custom_call.1']
    #allocation5 [shape = 'u8[98304]{0}', space=vmem, size = 0x18000, scoped, tag = 'input window, operand 1, single buffered']
    #allocation6 [shape = 's32[1]{0}', space=sflag, size = 0x4, scoped, tag = 'scoped memory for tpu_custom_call.1']
    #allocation7 [shape = 'u8[98304]{0}', space=vmem, size = 0x18000, scoped, tag = 'input window, operand 3, single buffered']
    #allocation8 [shape = 'u8[32768]{0}', space=vmem, size = 0x8000, scoped, tag = 'input window, operand 5, single buffered']
    #allocation9 [shape = 's32[1]{0}', space=sflag, size = 0x4, scoped, tag = 'scoped memory for tpu_custom_call.1']
    #allocation10 [shape = 'u8[16384]{0}', space=vmem, size = 0x4000, scoped, tag = 'output window, operand 0']
    %12 = vsyncpa [#allocation3], 0
    %s13 = scalar_lea.sflag [#allocation3], 1
    %14 = vsyncpa %s13, 0
    %15 = vsyncpa [#allocation6], 0
    %16 = vsyncpa [#allocation9], 0
    %17 = vsyncpa [#allocation4], 0
    %s18 = scalar_lea.sflag [#allocation4], 1
    %19 = vsyncpa %s18, 0
    loop: start=0, step=1, limit=4
    $region2: #{tpu_custom_call.1} parent=1 // loop_pre_header
      _
    $region3: #{tpu_custom_call.1} parent=1 // loop_header
      %s21 = sphi 0, %s25
      %p22 = scmp.ge.s32.totalorder %s21, 4
      %s28 = sphi 0, %s40
      %s29 = sphi 0, %s36
      %s30 = sphi 0, %s28
      %s31 = sphi 0, %s29
      %s32 = sphi 0, %s30
      %s33 = sphi 0, %s31
      %s45 = sphi 0, %s47
      %s48 = sphi 0, %s45
      %s49 = sphi 0, %s48
      %s65 = sphi 0, %s49
      %s69 = sphi 0, %s69
      %s71 = sphi 0, %s69
      %s72 = sphi 0, %s71
      %s86 = sphi 0, %s72
      %s90 = sphi 0, %s90
      %s92 = sphi 0, %s90
      %s93 = sphi 0, %s92
      %s107 = sphi 0, %s93
      %s111 = sphi 0, %s111
      %s113 = sphi 0, %s111
      %s114 = sphi 0, %s113
      %s128 = sphi 0, %s114
      %s132 = sphi 0, %s132
      %s134 = sphi 0, %s132
      %s135 = sphi 0, %s134
      %s149 = sphi 0, %s135
      %s153 = sphi 0, %s153
      %s155 = sphi 0, %s153
      %s156 = sphi 0, %s155
      %s170 = sphi 0, %s156
      %s174 = sphi 0, %s174
      %s176 = sphi 0, %s174
      %s177 = sphi 0, %s176
      %s191 = sphi 0, %s177
      %s199 = sphi 0, %s201
      %s202 = sphi 0, %s199
      %s203 = sphi 0, %s202
      %s219 = sphi 0, %s203
    $region4: #{tpu_custom_call.1} parent=1 // loop_header_branch
      %24 = sbr.rel (%p22) target = $region8
    $region5: #{tpu_custom_call.1} parent=1 // loop_body
      %s26 = ssub.s32 %s21, 1
      %s27 = ssub.s32 %s21, 2
      %s34 = sadd.s32 1, %s29
      %p35 = scmp.ge.s32.totalorder %s34, 1
      %s36 = scalar_select %p35, 0, %s34
      %s37 = sadd.s32 1, %s28
      %s38 = scalar_select %p35, %s37, %s28
      %p39 = scmp.ge.s32.totalorder %s38, 2
      %s40 = scalar_select %p39, 0, %s38
      %s41 = ssub.s32 %s28, %s40
      %s42 = ssub.s32 %s29, %s36
      %s43 = sor.u32 %s41, %s42
      %p44 = scmp.eq.s32.totalorder %s43, 0
      %s46 = sadd.s32 %s45, 1
      %s47 = scalar_select %p44, %s45, %s46
      %p50 = pneg %p44
      %p51 = scmp.eq.s32.totalorder %s21, 1
      %p52 = por %p50, %p51
      %p53 = scmp.ne.s32.totalorder %s45, %s48
      %p54 = scmp.eq.s32.totalorder %s21, 0
      %p55 = por %p53, %p54
      %p56 = scmp.ne.s32.totalorder %s45, %s48
      %p57 = scmp.eq.s32.totalorder %s26, 1
      %p58 = por %p56, %p57
      %p59 = scmp.ne.s32.totalorder %s48, %s49
      %p60 = scmp.eq.s32.totalorder %s26, 0
      %p61 = por %p59, %p60
      %p62 = scmp.ne.s32.totalorder %s48, %s49
      %p63 = scmp.eq.s32.totalorder %s27, 1
      %p64 = por %p62, %p63
      %p66 = scmp.ne.s32.totalorder %s49, %s65
      %p67 = scmp.eq.s32.totalorder %s27, 0
      %p68 = por %p66, %p67
      %s70 = sadd.s32 %s69, 1
      %p73 = scmp.eq.s32.totalorder %s21, 1
      %p74 = scmp.ne.s32.totalorder %s69, %s71
      %p75 = scmp.eq.s32.totalorder %s21, 0
      %p76 = por %p74, %p75
      %p77 = scmp.ne.s32.totalorder %s69, %s71
      %p78 = scmp.eq.s32.totalorder %s26, 1
      %p79 = por %p77, %p78
      %p80 = scmp.ne.s32.totalorder %s71, %s72
      %p81 = scmp.eq.s32.totalorder %s26, 0
      %p82 = por %p80, %p81
      %p83 = scmp.ne.s32.totalorder %s71, %s72
      %p84 = scmp.eq.s32.totalorder %s27, 1
      %p85 = por %p83, %p84
      %p87 = scmp.ne.s32.totalorder %s72, %s86
      %p88 = scmp.eq.s32.totalorder %s27, 0
      %p89 = por %p87, %p88
      %s91 = sadd.s32 %s90, 1
      %p94 = scmp.eq.s32.totalorder %s21, 1
      %p95 = scmp.ne.s32.totalorder %s90, %s92
      %p96 = scmp.eq.s32.totalorder %s21, 0
      %p97 = por %p95, %p96
      %p98 = scmp.ne.s32.totalorder %s90, %s92
      %p99 = scmp.eq.s32.totalorder %s26, 1
      %p100 = por %p98, %p99
      %p101 = scmp.ne.s32.totalorder %s92, %s93
      %p102 = scmp.eq.s32.totalorder %s26, 0
      %p103 = por %p101, %p102
      %p104 = scmp.ne.s32.totalorder %s92, %s93
      %p105 = scmp.eq.s32.totalorder %s27, 1
      %p106 = por %p104, %p105
      %p108 = scmp.ne.s32.totalorder %s93, %s107
      %p109 = scmp.eq.s32.totalorder %s27, 0
      %p110 = por %p108, %p109
      %s112 = sadd.s32 %s111, 1
      %p115 = scmp.eq.s32.totalorder %s21, 1
      %p116 = scmp.ne.s32.totalorder %s111, %s113
      %p117 = scmp.eq.s32.totalorder %s21, 0
      %p118 = por %p116, %p117
      %p119 = scmp.ne.s32.totalorder %s111, %s113
      %p120 = scmp.eq.s32.totalorder %s26, 1
      %p121 = por %p119, %p120
      %p122 = scmp.ne.s32.totalorder %s113, %s114
      %p123 = scmp.eq.s32.totalorder %s26, 0
      %p124 = por %p122, %p123
      %p125 = scmp.ne.s32.totalorder %s113, %s114
      %p126 = scmp.eq.s32.totalorder %s27, 1
      %p127 = por %p125, %p126
      %p129 = scmp.ne.s32.totalorder %s114, %s128
      %p130 = scmp.eq.s32.totalorder %s27, 0
      %p131 = por %p129, %p130
      %s133 = sadd.s32 %s132, 1
      %p136 = scmp.eq.s32.totalorder %s21, 1
      %p137 = scmp.ne.s32.totalorder %s132, %s134
      %p138 = scmp.eq.s32.totalorder %s21, 0
      %p139 = por %p137, %p138
      %p140 = scmp.ne.s32.totalorder %s132, %s134
      %p141 = scmp.eq.s32.totalorder %s26, 1
      %p142 = por %p140, %p141
      %p143 = scmp.ne.s32.totalorder %s134, %s135
      %p144 = scmp.eq.s32.totalorder %s26, 0
      %p145 = por %p143, %p144
      %p146 = scmp.ne.s32.totalorder %s134, %s135
      %p147 = scmp.eq.s32.totalorder %s27, 1
      %p148 = por %p146, %p147
      %p150 = scmp.ne.s32.totalorder %s135, %s149
      %p151 = scmp.eq.s32.totalorder %s27, 0
      %p152 = por %p150, %p151
      %s154 = sadd.s32 %s153, 1
      %p157 = scmp.eq.s32.totalorder %s21, 1
      %p158 = scmp.ne.s32.totalorder %s153, %s155
      %p159 = scmp.eq.s32.totalorder %s21, 0
      %p160 = por %p158, %p159
      %p161 = scmp.ne.s32.totalorder %s153, %s155
      %p162 = scmp.eq.s32.totalorder %s26, 1
      %p163 = por %p161, %p162
      %p164 = scmp.ne.s32.totalorder %s155, %s156
      %p165 = scmp.eq.s32.totalorder %s26, 0
      %p166 = por %p164, %p165
      %p167 = scmp.ne.s32.totalorder %s155, %s156
      %p168 = scmp.eq.s32.totalorder %s27, 1
      %p169 = por %p167, %p168
      %p171 = scmp.ne.s32.totalorder %s156, %s170
      %p172 = scmp.eq.s32.totalorder %s27, 0
      %p173 = por %p171, %p172
      %s175 = sadd.s32 %s174, 1
      %p178 = scmp.eq.s32.totalorder %s21, 1
      %p179 = scmp.ne.s32.totalorder %s174, %s176
      %p180 = scmp.eq.s32.totalorder %s21, 0
      %p181 = por %p179, %p180
      %p182 = scmp.ne.s32.totalorder %s174, %s176
      %p183 = scmp.eq.s32.totalorder %s26, 1
      %p184 = por %p182, %p183
      %p185 = scmp.ne.s32.totalorder %s176, %s177
      %p186 = scmp.eq.s32.totalorder %s26, 0
      %p187 = por %p185, %p186
      %p188 = scmp.ne.s32.totalorder %s176, %s177
      %p189 = scmp.eq.s32.totalorder %s27, 1
      %p190 = por %p188, %p189
      %p192 = scmp.ne.s32.totalorder %s177, %s191
      %p193 = scmp.eq.s32.totalorder %s27, 0
      %p194 = por %p192, %p193
      %s195 = ssub.s32 %s28, %s40
      %s196 = ssub.s32 %s29, %s36
      %s197 = sor.u32 %s195, %s196
      %p198 = scmp.eq.s32.totalorder %s197, 0
      %s200 = sadd.s32 %s199, 1
      %s201 = scalar_select %p198, %s199, %s200
      %p204 = pneg %p198
      %p205 = scmp.eq.s32.totalorder %s21, 1
      %p206 = por %p204, %p205
      %p207 = scmp.ne.s32.totalorder %s199, %s202
      %p208 = scmp.eq.s32.totalorder %s21, 0
      %p209 = por %p207, %p208
      %p210 = scmp.ne.s32.totalorder %s199, %s202
      %p211 = scmp.eq.s32.totalorder %s26, 1
      %p212 = por %p210, %p211
      %p213 = scmp.ne.s32.totalorder %s202, %s203
      %p214 = scmp.eq.s32.totalorder %s26, 0
      %p215 = por %p213, %p214
      %p216 = scmp.ne.s32.totalorder %s202, %s203
      %p217 = scmp.eq.s32.totalorder %s27, 1
      %p218 = por %p216, %p217
      %p220 = scmp.ne.s32.totalorder %s203, %s219
      %p221 = scmp.eq.s32.totalorder %s27, 0
      %p222 = por %p220, %p221
      %p223 = scmp.le.s32.totalorder 1, %s21
      %p224 = scmp.lt.s32.totalorder %s21, 3
      %p225 = pnand %p223, %p224
      %p226 = pneg %p225
      // Predicated region
      $region9: #{tpu_custom_call.1} parent=5 // pred_check
        _
      $region10: #{tpu_custom_call.1} parent=5 // pred_check_branch
        %228 = sbr.rel (%p225) target = $region12
      $region11: #{tpu_custom_call.1} parent=5 // pred_region
        %s229 = ssub.s32 %s21, 1
        // Predicated region
        $region13: #{tpu_custom_call.1} parent=11 // pred_check
          %p230 = pneg %p82
        $region14: #{tpu_custom_call.1} parent=11 // pred_check_branch
          %232 = sbr.rel (%p230) target = $region16
        $region15: #{tpu_custom_call.1} parent=11 // pred_region
          %s234 = ssub.s32 3072, 3072
          %235 = vsyncadd [#allocation6], %s234
          %s236 = sshll.u32 [#allocation5], 4
          %s237 = int_to_ptr.vmem [resolvable:$true] %s236
          %242 = dma.hbm_to_vmem [thread:$0]  %s1, 3072, %s237, [#allocation6], 64, 64, 4
        $region16: #{tpu_custom_call.1} parent=11 // pred_fallthru
          _
        // Predicated region
        $region17: #{tpu_custom_call.1} parent=11 // pred_check
          %p243 = pneg %p103
        $region18: #{tpu_custom_call.1} parent=11 // pred_check_branch
          %245 = sbr.rel (%p243) target = $region20
        $region19: #{tpu_custom_call.1} parent=11 // pred_region
          _
        $region20: #{tpu_custom_call.1} parent=11 // pred_fallthru
          _
        // Predicated region
        $region21: #{tpu_custom_call.1} parent=11 // pred_check
          %p246 = pneg %p124
        $region22: #{tpu_custom_call.1} parent=11 // pred_check_branch
          %248 = sbr.rel (%p246) target = $region24
        $region23: #{tpu_custom_call.1} parent=11 // pred_region
          %s250 = ssub.s32 3072, 3072
          %251 = vsyncadd [#allocation6], %s250
          %s252 = sshll.u32 [#allocation7], 4
          %s253 = int_to_ptr.vmem [resolvable:$true] %s252
          %258 = dma.hbm_to_vmem [thread:$0]  %s3, 3072, %s253, [#allocation6], 64, 64, 4
        $region24: #{tpu_custom_call.1} parent=11 // pred_fallthru
          _
        // Predicated region
        $region25: #{tpu_custom_call.1} parent=11 // pred_check
          %p259 = pneg %p145
        $region26: #{tpu_custom_call.1} parent=11 // pred_check_branch
          %261 = sbr.rel (%p259) target = $region28
        $region27: #{tpu_custom_call.1} parent=11 // pred_region
          _
        $region28: #{tpu_custom_call.1} parent=11 // pred_fallthru
          _
        // Predicated region
        $region29: #{tpu_custom_call.1} parent=11 // pred_check
          %p262 = pneg %p166
        $region30: #{tpu_custom_call.1} parent=11 // pred_check_branch
          %264 = sbr.rel (%p262) target = $region32
        $region31: #{tpu_custom_call.1} parent=11 // pred_region
          %s266 = ssub.s32 1024, 1024
          %267 = vsyncadd [#allocation9], %s266
          %s268 = sshll.u32 [#allocation8], 4
          %s269 = int_to_ptr.vmem [resolvable:$true] %s268
          %274 = dma.hbm_to_vmem [thread:$0]  %s5, 1024, %s269, [#allocation9], 64, 64, 4
        $region32: #{tpu_custom_call.1} parent=11 // pred_fallthru
          _
        // Predicated region
        $region33: #{tpu_custom_call.1} parent=11 // pred_check
          %p275 = pneg %p187
        $region34: #{tpu_custom_call.1} parent=11 // pred_check_branch
          %277 = sbr.rel (%p275) target = $region36
        $region35: #{tpu_custom_call.1} parent=11 // pred_region
          _
        $region36: #{tpu_custom_call.1} parent=11 // pred_fallthru
          _
      $region12: #{tpu_custom_call.1} parent=5 // pred_fallthru
        _
      %p278 = scmp.lt.s32.totalorder %s21, 2
      // Predicated region
      $region37: #{tpu_custom_call.1} parent=5 // pred_check
        %p279 = pneg %p278
      $region38: #{tpu_custom_call.1} parent=5 // pred_check_branch
        %281 = sbr.rel (%p279) target = $region40
      $region39: #{tpu_custom_call.1} parent=5 // pred_region
        // Predicated region
        $region41: #{tpu_custom_call.1} parent=39 // pred_check
          %p282 = pneg %p55
        $region42: #{tpu_custom_call.1} parent=39 // pred_check_branch
          %284 = sbr.rel (%p282) target = $region44
        $region43: #{tpu_custom_call.1} parent=39 // pred_region
          %s285 = sand.u32 %s45, 1
          %s286 = scalar_lea.sflag [#allocation3], %s285
          %s287 = sand.u32 %s45, 1
          %s288 = smul.addr %s287, 16
          %s289 = scalar_lea.vmem [#allocation2], %s288
          %s290 = smul.u32 2, %s29
          %s292 = ssub.s32 256, 256
          %293 = vsyncadd %s286, %s292
          %s294 = smul.addr %s28, 2
          %s295 = sadd.s32 %s290, %s294
          %s296 = smul.addr %s295, 128
          %s297 = scalar_lea.hbm %s0, %s296
          %s298 = sshll.u32 %s289, 4
          %s299 = int_to_ptr.vmem [resolvable:$true] %s298
          %304 = dma.hbm_to_vmem [thread:$0]  %s297, 256, %s299, %s286, 128, 128, 8
        $region44: #{tpu_custom_call.1} parent=39 // pred_fallthru
          _
      $region40: #{tpu_custom_call.1} parent=5 // pred_fallthru
        _
      %p305 = scmp.le.s32.totalorder 1, %s21
      %p306 = scmp.lt.s32.totalorder %s21, 3
      %p307 = pnand %p305, %p306
      %p308 = pneg %p307
      // Predicated region
      $region45: #{tpu_custom_call.1} parent=5 // pred_check
        _
      $region46: #{tpu_custom_call.1} parent=5 // pred_check_branch
        %310 = sbr.rel (%p307) target = $region48
      $region47: #{tpu_custom_call.1} parent=5 // pred_region
        %s311 = ssub.s32 %s21, 1
        %s312 = sand.u32 %s48, 1
        %s313 = scalar_lea.sflag [#allocation3], %s312
        %s314 = sand.u32 %s48, 1
        %s315 = smul.addr %s314, 16
        %s316 = scalar_lea.vmem [#allocation2], %s315
        // Predicated region
        $region49: #{tpu_custom_call.1} parent=47 // pred_check
          %p317 = pneg %p61
        $region50: #{tpu_custom_call.1} parent=47 // pred_check_branch
          %319 = sbr.rel (%p317) target = $region52
        $region51: #{tpu_custom_call.1} parent=47 // pred_region
          %320 = dma.done %s313, 256
        $region52: #{tpu_custom_call.1} parent=47 // pred_fallthru
          _
        // Predicated region
        $region53: #{tpu_custom_call.1} parent=47 // pred_check
          %p321 = pneg %p82
        $region54: #{tpu_custom_call.1} parent=47 // pred_check_branch
          %323 = sbr.rel (%p321) target = $region56
        $region55: #{tpu_custom_call.1} parent=47 // pred_region
          %324 = dma.done [#allocation6], 3072
        $region56: #{tpu_custom_call.1} parent=47 // pred_fallthru
          _
        // Predicated region
        $region57: #{tpu_custom_call.1} parent=47 // pred_check
          %p325 = pneg %p124
        $region58: #{tpu_custom_call.1} parent=47 // pred_check_branch
          %327 = sbr.rel (%p325) target = $region60
        $region59: #{tpu_custom_call.1} parent=47 // pred_region
          %328 = dma.done [#allocation6], 3072
        $region60: #{tpu_custom_call.1} parent=47 // pred_fallthru
          _
        // Predicated region
        $region61: #{tpu_custom_call.1} parent=47 // pred_check
          %p329 = pneg %p166
        $region62: #{tpu_custom_call.1} parent=47 // pred_check_branch
          %331 = sbr.rel (%p329) target = $region64
        $region63: #{tpu_custom_call.1} parent=47 // pred_region
          %332 = dma.done [#allocation9], 1024
        $region64: #{tpu_custom_call.1} parent=47 // pred_fallthru
          _
        %s333 = sand.u32 %s48, 1
        %s334 = scalar_lea.sflag [#allocation3], %s333
        %s335 = sand.u32 %s48, 1
        %s336 = smul.addr %s335, 16
        %s337 = scalar_lea.vmem [#allocation2], %s336
        %p338 = pneg %p61
        %p339 = pneg %p58
        %p340 = pneg %p82
        %p341 = pneg %p79
        %p342 = pneg %p103
        %p343 = pneg %p100
        %p344 = pneg %p124
        %p345 = pneg %p121
        %p346 = pneg %p145
        %p347 = pneg %p142
        %p348 = pneg %p166
        %p349 = pneg %p163
        %p350 = pneg %p187
        %p351 = pneg %p184
        %p352 = pneg %p215
        %p353 = pneg %p212
        %s354 = sand.u32 %s202, 1
        %s355 = scalar_lea.sflag [#allocation4], %s354
        %s356 = sand.u32 %s202, 1
        %s357 = smul.addr %s356, 16
        %s358 = scalar_lea.vmem [#allocation10], %s357
        %s359 = smul.u32 2, %s31
        %s360 = smul.u32 2, %s31
        %v362 = vld [vmem:[%s316] sm:$0xff]
        %v363 = vld [vmem:[%s316 + $0x8] sm:$0xff]
        %v364 = vpack.c.bf16 %v363, %v362
        %v366 = vrot.slane %v364, 4
        %vm368 = vcmask 1043456
        %v371 = vsel %vm368, 0, %v366
        %v373 = vld [vmem:[%s2] sm:$0x1]
        %v374 = vld [vmem:[#allocation5] sm:$0xf]
        %v375 = vld [vmem:[#allocation5 + $0x4] sm:$0xf]
        %v376 = vld [vmem:[#allocation5 + $0x8] sm:$0xf]
        %v377 = vld [vmem:[#allocation5 + $0xc] sm:$0xf]
        %v378 = vld [vmem:[#allocation5 + $0x10] sm:$0xf]
        %v379 = vld [vmem:[#allocation5 + $0x14] sm:$0xf]
        %v380 = vld [vmem:[#allocation5 + $0x18] sm:$0xf]
        %v381 = vld [vmem:[#allocation5 + $0x1c] sm:$0xf]
        %v382 = vld [vmem:[#allocation5 + $0x20] sm:$0xf]
        %v383 = vld [vmem:[#allocation5 + $0x24] sm:$0xf]
        %v384 = vld [vmem:[#allocation5 + $0x28] sm:$0xf]
        %v385 = vld [vmem:[#allocation5 + $0x2c] sm:$0xf]
        %v386 = vld [vmem:[#allocation5 + $0x30] sm:$0xf]
        %v387 = vld [vmem:[#allocation5 + $0x34] sm:$0xf]
        %v388 = vld [vmem:[#allocation5 + $0x38] sm:$0xf]
        %v389 = vld [vmem:[#allocation5 + $0x3c] sm:$0xf]
        %v406 = vunpack.c.l.b16 %v374
        %v407 = vunpack.c.l.b16 %v375
        %v408 = vunpack.c.l.b16 %v376
        %v409 = vunpack.c.l.b16 %v377
        %v410 = vunpack.c.l.b16 %v378
        %v411 = vunpack.c.l.b16 %v379
        %v412 = vunpack.c.l.b16 %v380
        %v413 = vunpack.c.l.b16 %v381
        %v414 = vunpack.c.l.b16 %v382
        %v415 = vunpack.c.l.b16 %v383
        %v416 = vunpack.c.l.b16 %v384
        %v417 = vunpack.c.l.b16 %v385
        %v418 = vunpack.c.l.b16 %v386
        %v419 = vunpack.c.l.b16 %v387
        %v420 = vunpack.c.l.b16 %v388
        %v421 = vunpack.c.l.b16 %v389
        %v422 = vpack.c.b16 %v407, %v406
        %v423 = vpack.c.b16 %v409, %v408
        %v424 = vpack.c.b16 %v411, %v410
        %v425 = vpack.c.b16 %v413, %v412
        %v426 = vpack.c.b16 %v415, %v414
        %v427 = vpack.c.b16 %v417, %v416
        %v428 = vpack.c.b16 %v419, %v418
        %v429 = vpack.c.b16 %v421, %v420
        %438 = vmatprep.subr.bf16.mxu0 0
        %439 = vmatpush1.bf16.msra.mxu0 %v422
        %440 = vmatprep.subr.bf16.mxu0 0
        %441 = vmatpush1.bf16.msra.mxu0 %v423
        %442 = vmatprep.subr.bf16.mxu0 0
        %443 = vmatpush1.bf16.msra.mxu0 %v424
        %444 = vmatprep.subr.bf16.mxu0 0
        %445 = vmatpush1.bf16.msra.mxu0 %v425
        %446 = vmatprep.subr.bf16.mxu0 0
        %447 = vmatpush1.bf16.msra.mxu0 %v426
        %448 = vmatprep.subr.bf16.mxu0 0
        %449 = vmatpush1.bf16.msra.mxu0 %v427
        %450 = vmatprep.subr.bf16.mxu0 0
        %451 = vmatpush1.bf16.msra.mxu0 %v428
        %452 = vmatprep.subr.bf16.mxu0 0
        %453 = vmatpush1.bf16.msra.mxu0 %v429
        %454 = vmatprep.subr.bf16.mxu0 0
        %455 = vmatpush1.bf16.msra.mxu0 0
        %456 = vmatprep.subr.bf16.mxu0 0
        %457 = vmatpush1.bf16.msra.mxu0 0
        %458 = vmatprep.subr.bf16.mxu0 0
        %459 = vmatpush1.bf16.msra.mxu0 0
        %460 = vmatprep.subr.bf16.mxu0 0
        %461 = vmatpush1.bf16.msra.mxu0 0
        %462 = vmatprep.subr.bf16.mxu0 0
        %463 = vmatpush1.bf16.msra.mxu0 0
        %464 = vmatprep.subr.bf16.mxu0 0
        %465 = vmatpush1.bf16.msra.mxu0 0
        %466 = vmatprep.subr.bf16.mxu0 0
        %467 = vmatpush1.bf16.msra.mxu0 0
        %468 = vmatprep.subr.bf16.mxu0 0
        %469 = vmatpush1.bf16.msra.mxu0 0
        %470 = vmatprep.mubr.bf16.mxu0 0
        %471 = vmatmul.mubr.bf16.gmra.mrb[0].mxu0 %v371
        %v472 = vpop.f32.mrb[0].mxu0
        %v473 = vadd.f32 0.0, %v472
        %v474 = vpop.f32.mrb[0].mxu0
        %v475 = vpop.f32.mrb[0].mxu0
        %v476 = vadd.f32 0.0, %v475
        %v477 = vpop.f32.mrb[0].mxu0
        %478 = vmatprep.mubr.bf16.mxu0 0
        %479 = vmatmul.mubr.bf16.gmra.mrb[0].mxu0 %v366
        %v480 = vpop.f32.mrb[0].mxu0
        %v481 = vadd.f32 0.0, %v480
        %v482 = vpop.f32.mrb[0].mxu0
        %v483 = vpop.f32.mrb[0].mxu0
        %v484 = vpop.f32.mrb[0].mxu0
        %485 = vdwg.mxu0
        %v487 = vlaneseq
        %v488 = vshrl.u32 %v487, 7
        %v489 = vsub.s32 0, %v488
        %v490 = vrot.slane %v373, %v489
        %v492 = vadd.f32 %v490, %v473
        %v493 = vadd.f32 %v490, %v476
        %v494 = vadd.f32 %v490, %v481
        %s495 = scalar_lea.vmem [#allocation5], 64
        %v496 = vld [vmem:[%s495] sm:$0xf]
        %v497 = vld [vmem:[%s495 + $0x4] sm:$0xf]
        %v498 = vld [vmem:[%s495 + $0x8] sm:$0xf]
        %v499 = vld [vmem:[%s495 + $0xc] sm:$0xf]
        %v500 = vld [vmem:[%s495 + $0x10] sm:$0xf]
        %v501 = vld [vmem:[%s495 + $0x14] sm:$0xf]
        %v502 = vld [vmem:[%s495 + $0x18] sm:$0xf]
        %v503 = vld [vmem:[%s495 + $0x1c] sm:$0xf]
        %v504 = vld [vmem:[%s495 + $0x20] sm:$0xf]
        %v505 = vld [vmem:[%s495 + $0x24] sm:$0xf]
        %v506 = vld [vmem:[%s495 + $0x28] sm:$0xf]
        %v507 = vld [vmem:[%s495 + $0x2c] sm:$0xf]
        %v508 = vld [vmem:[%s495 + $0x30] sm:$0xf]
        %v509 = vld [vmem:[%s495 + $0x34] sm:$0xf]
        %v510 = vld [vmem:[%s495 + $0x38] sm:$0xf]
        %v511 = vld [vmem:[%s495 + $0x3c] sm:$0xf]
        %vm513 = vcmask 1046528
        %v514 = vrot.slane %v371, 1
        %v515 = vrot.slane %v366, 1
        %v516 = vsel %vm513, %v514, %v515
        %v535 = vunpack.c.l.b16 %v496
        %v536 = vunpack.c.l.b16 %v497
        %v537 = vunpack.c.l.b16 %v498
        %v538 = vunpack.c.l.b16 %v499
        %v539 = vunpack.c.l.b16 %v500
        %v540 = vunpack.c.l.b16 %v501
        %v541 = vunpack.c.l.b16 %v502
        %v542 = vunpack.c.l.b16 %v503
        %v543 = vunpack.c.l.b16 %v504
        %v544 = vunpack.c.l.b16 %v505
        %v545 = vunpack.c.l.b16 %v506
        %v546 = vunpack.c.l.b16 %v507
        %v547 = vunpack.c.l.b16 %v508
        %v548 = vunpack.c.l.b16 %v509
        %v549 = vunpack.c.l.b16 %v510
        %v550 = vunpack.c.l.b16 %v511
        %v551 = vpack.c.b16 %v536, %v535
        %v552 = vpack.c.b16 %v538, %v537
        %v553 = vpack.c.b16 %v540, %v539
        %v554 = vpack.c.b16 %v542, %v541
        %v555 = vpack.c.b16 %v544, %v543
        %v556 = vpack.c.b16 %v546, %v545
        %v557 = vpack.c.b16 %v548, %v547
        %v558 = vpack.c.b16 %v550, %v549
        %567 = vmatprep.subr.bf16.mxu0 0
        %568 = vmatpush1.bf16.msra.mxu0 %v551
        %569 = vmatprep.subr.bf16.mxu0 0
        %570 = vmatpush1.bf16.msra.mxu0 %v552
        %571 = vmatprep.subr.bf16.mxu0 0
        %572 = vmatpush1.bf16.msra.mxu0 %v553
        %573 = vmatprep.subr.bf16.mxu0 0
        %574 = vmatpush1.bf16.msra.mxu0 %v554
        %575 = vmatprep.subr.bf16.mxu0 0
        %576 = vmatpush1.bf16.msra.mxu0 %v555
        %577 = vmatprep.subr.bf16.mxu0 0
        %578 = vmatpush1.bf16.msra.mxu0 %v556
        %579 = vmatprep.subr.bf16.mxu0 0
        %580 = vmatpush1.bf16.msra.mxu0 %v557
        %581 = vmatprep.subr.bf16.mxu0 0
        %582 = vmatpush1.bf16.msra.mxu0 %v558
        %583 = vmatprep.subr.bf16.mxu0 0
        %584 = vmatpush1.bf16.msra.mxu0 0
        %585 = vmatprep.subr.bf16.mxu0 0
        %586 = vmatpush1.bf16.msra.mxu0 0
        %587 = vmatprep.subr.bf16.mxu0 0
        %588 = vmatpush1.bf16.msra.mxu0 0
        %589 = vmatprep.subr.bf16.mxu0 0
        %590 = vmatpush1.bf16.msra.mxu0 0
        %591 = vmatprep.subr.bf16.mxu0 0
        %592 = vmatpush1.bf16.msra.mxu0 0
        %593 = vmatprep.subr.bf16.mxu0 0
        %594 = vmatpush1.bf16.msra.mxu0 0
        %595 = vmatprep.subr.bf16.mxu0 0
        %596 = vmatpush1.bf16.msra.mxu0 0
        %597 = vmatprep.subr.bf16.mxu0 0
        %598 = vmatpush1.bf16.msra.mxu0 0
        %599 = vmatprep.mubr.bf16.mxu0 0
        %600 = vmatmul.mubr.bf16.gmra.mrb[0].mxu0 %v516
        %v601 = vpop.f32.mrb[0].mxu0
        %v602 = vadd.f32 0.0, %v601
        %v603 = vpop.f32.mrb[0].mxu0
        %v604 = vpop.f32.mrb[0].mxu0
        %v605 = vadd.f32 0.0, %v604
        %v606 = vpop.f32.mrb[0].mxu0
        %607 = vmatprep.mubr.bf16.mxu0 0
        %608 = vmatmul.mubr.bf16.gmra.mrb[0].mxu0 %v515
        %v609 = vpop.f32.mrb[0].mxu0
        %v610 = vadd.f32 0.0, %v609
        %v611 = vpop.f32.mrb[0].mxu0
        %v612 = vpop.f32.mrb[0].mxu0
        %v613 = vpop.f32.mrb[0].mxu0
        %614 = vdwg.mxu0
        %v615 = vadd.f32 %v492, %v602
        %v616 = vadd.f32 %v493, %v605
        %v617 = vadd.f32 %v494, %v610
        %s618 = scalar_lea.vmem [#allocation5], 128
        %v619 = vld [vmem:[%s618] sm:$0xf]
        %v620 = vld [vmem:[%s618 + $0x4] sm:$0xf]
        %v621 = vld [vmem:[%s618 + $0x8] sm:$0xf]
        %v622 = vld [vmem:[%s618 + $0xc] sm:$0xf]
        %v623 = vld [vmem:[%s618 + $0x10] sm:$0xf]
        %v624 = vld [vmem:[%s618 + $0x14] sm:$0xf]
        %v625 = vld [vmem:[%s618 + $0x18] sm:$0xf]
        %v626 = vld [vmem:[%s618 + $0x1c] sm:$0xf]
        %v627 = vld [vmem:[%s618 + $0x20] sm:$0xf]
        %v628 = vld [vmem:[%s618 + $0x24] sm:$0xf]
        %v629 = vld [vmem:[%s618 + $0x28] sm:$0xf]
        %v630 = vld [vmem:[%s618 + $0x2c] sm:$0xf]
        %v631 = vld [vmem:[%s618 + $0x30] sm:$0xf]
        %v632 = vld [vmem:[%s618 + $0x34] sm:$0xf]
        %v633 = vld [vmem:[%s618 + $0x38] sm:$0xf]
        %v634 = vld [vmem:[%s618 + $0x3c] sm:$0xf]
        %vm635 = vcmask 1045504
        %v636 = vrot.slane %v371, 2
        %v637 = vrot.slane %v366, 2
        %v638 = vsel %vm635, %v636, %v637
        %v657 = vunpack.c.l.b16 %v619
        %v658 = vunpack.c.l.b16 %v620
        %v659 = vunpack.c.l.b16 %v621
        %v660 = vunpack.c.l.b16 %v622
        %v661 = vunpack.c.l.b16 %v623
        %v662 = vunpack.c.l.b16 %v624
        %v663 = vunpack.c.l.b16 %v625
        %v664 = vunpack.c.l.b16 %v626
        %v665 = vunpack.c.l.b16 %v627
        %v666 = vunpack.c.l.b16 %v628
        %v667 = vunpack.c.l.b16 %v629
        %v668 = vunpack.c.l.b16 %v630
        %v669 = vunpack.c.l.b16 %v631
        %v670 = vunpack.c.l.b16 %v632
        %v671 = vunpack.c.l.b16 %v633
        %v672 = vunpack.c.l.b16 %v634
        %v673 = vpack.c.b16 %v658, %v657
        %v674 = vpack.c.b16 %v660, %v659
        %v675 = vpack.c.b16 %v662, %v661
        %v676 = vpack.c.b16 %v664, %v663
        %v677 = vpack.c.b16 %v666, %v665
        %v678 = vpack.c.b16 %v668, %v667
        %v679 = vpack.c.b16 %v670, %v669
        %v680 = vpack.c.b16 %v672, %v671
        %689 = vmatprep.subr.bf16.mxu0 0
        %690 = vmatpush1.bf16.msra.mxu0 %v673
        %691 = vmatprep.subr.bf16.mxu0 0
        %692 = vmatpush1.bf16.msra.mxu0 %v674
        %693 = vmatprep.subr.bf16.mxu0 0
        %694 = vmatpush1.bf16.msra.mxu0 %v675
        %695 = vmatprep.subr.bf16.mxu0 0
        %696 = vmatpush1.bf16.msra.mxu0 %v676
        %697 = vmatprep.subr.bf16.mxu0 0
        %698 = vmatpush1.bf16.msra.mxu0 %v677
        %699 = vmatprep.subr.bf16.mxu0 0
        %700 = vmatpush1.bf16.msra.mxu0 %v678
        %701 = vmatprep.subr.bf16.mxu0 0
        %702 = vmatpush1.bf16.msra.mxu0 %v679
        %703 = vmatprep.subr.bf16.mxu0 0
        %704 = vmatpush1.bf16.msra.mxu0 %v680
        %705 = vmatprep.subr.bf16.mxu0 0
        %706 = vmatpush1.bf16.msra.mxu0 0
        %707 = vmatprep.subr.bf16.mxu0 0
        %708 = vmatpush1.bf16.msra.mxu0 0
        %709 = vmatprep.subr.bf16.mxu0 0
        %710 = vmatpush1.bf16.msra.mxu0 0
        %711 = vmatprep.subr.bf16.mxu0 0
        %712 = vmatpush1.bf16.msra.mxu0 0
        %713 = vmatprep.subr.bf16.mxu0 0
        %714 = vmatpush1.bf16.msra.mxu0 0
        %715 = vmatprep.subr.bf16.mxu0 0
        %716 = vmatpush1.bf16.msra.mxu0 0
        %717 = vmatprep.subr.bf16.mxu0 0
        %718 = vmatpush1.bf16.msra.mxu0 0
        %719 = vmatprep.subr.bf16.mxu0 0
        %720 = vmatpush1.bf16.msra.mxu0 0
        %721 = vmatprep.mubr.bf16.mxu0 0
        %722 = vmatmul.mubr.bf16.gmra.mrb[0].mxu0 %v638
        %v723 = vpop.f32.mrb[0].mxu0
        %v724 = vadd.f32 0.0, %v723
        %v725 = vpop.f32.mrb[0].mxu0
        %v726 = vpop.f32.mrb[0].mxu0
        %v727 = vadd.f32 0.0, %v726
        %v728 = vpop.f32.mrb[0].mxu0
        %729 = vmatprep.mubr.bf16.mxu0 0
        %730 = vmatmul.mubr.bf16.gmra.mrb[0].mxu0 %v637
        %v731 = vpop.f32.mrb[0].mxu0
        %v732 = vadd.f32 0.0, %v731
        %v733 = vpop.f32.mrb[0].mxu0
        %v734 = vpop.f32.mrb[0].mxu0
        %v735 = vpop.f32.mrb[0].mxu0
        %736 = vdwg.mxu0
        %v737 = vadd.f32 %v615, %v724
        %v738 = vadd.f32 %v616, %v727
        %v739 = vadd.f32 %v617, %v732
        %v740 = vmax.f32 %v737, 0.0
        %v741 = vmax.f32 %v738, 0.0
        %v742 = vmax.f32 %v739, 0.0
        %s743 = smul.u32 %s31, 16
        %s744 = ssub.s32 %s743, 4
        %v745 = vlaneseq
        %v746 = vshrl.u32 %v745, 7
        %v747 = vadd.s32 %v746, 8
        %v748 = vadd.s32 %v746, 16
        %v749 = vstv %s744
        %v750 = vadd.s32 %v749, %v746
        %v751 = vadd.s32 %v749, %v747
        %v752 = vadd.s32 %v749, %v748
        %vm753 = vcmp.ge.s32.totalorder %v750, 0
        %vm754 = vcmp.ge.s32.totalorder %v751, 0
        %vm755 = vcmp.ge.s32.totalorder %v752, 0
        %v756 = vsel %vm753, 1, 0
        %v757 = vsel %vm754, 1, 0
        %v758 = vsel %vm755, 1, 0
        %vm759 = vcmp.eq.s32.totalorder %v756, 1
        %vm760 = vcmp.eq.s32.totalorder %v757, 1
        %vm761 = vcmp.eq.s32.totalorder %v758, 1
        %v762 = vsel %vm759, %v740, 0.0
        %v763 = vsel %vm760, %v741, 0.0
        %v764 = vsel %vm761, %v742, 0.0
        %v765 = vpack.c.bf16 %v763, %v762
        %v766 = vpack.c.bf16 %v764, %v764
        %v767 = vld [vmem:[%s4] sm:$0x1]
        %v768 = vld [vmem:[#allocation7] sm:$0xf]
        %v769 = vld [vmem:[#allocation7 + $0x4] sm:$0xf]
        %v770 = vld [vmem:[#allocation7 + $0x8] sm:$0xf]
        %v771 = vld [vmem:[#allocation7 + $0xc] sm:$0xf]
        %v772 = vld [vmem:[#allocation7 + $0x10] sm:$0xf]
        %v773 = vld [vmem:[#allocation7 + $0x14] sm:$0xf]
        %v774 = vld [vmem:[#allocation7 + $0x18] sm:$0xf]
        %v775 = vld [vmem:[#allocation7 + $0x1c] sm:$0xf]
        %v776 = vld [vmem:[#allocation7 + $0x20] sm:$0xf]
        %v777 = vld [vmem:[#allocation7 + $0x24] sm:$0xf]
        %v778 = vld [vmem:[#allocation7 + $0x28] sm:$0xf]
        %v779 = vld [vmem:[#allocation7 + $0x2c] sm:$0xf]
        %v780 = vld [vmem:[#allocation7 + $0x30] sm:$0xf]
        %v781 = vld [vmem:[#allocation7 + $0x34] sm:$0xf]
        %v782 = vld [vmem:[#allocation7 + $0x38] sm:$0xf]
        %v783 = vld [vmem:[#allocation7 + $0x3c] sm:$0xf]
        %v800 = vunpack.c.l.b16 %v768
        %v801 = vunpack.c.l.b16 %v769
        %v802 = vunpack.c.l.b16 %v770
        %v803 = vunpack.c.l.b16 %v771
        %v804 = vunpack.c.l.b16 %v772
        %v805 = vunpack.c.l.b16 %v773
        %v806 = vunpack.c.l.b16 %v774
        %v807 = vunpack.c.l.b16 %v775
        %v808 = vunpack.c.l.b16 %v776
        %v809 = vunpack.c.l.b16 %v777
        %v810 = vunpack.c.l.b16 %v778
        %v811 = vunpack.c.l.b16 %v779
        %v812 = vunpack.c.l.b16 %v780
        %v813 = vunpack.c.l.b16 %v781
        %v814 = vunpack.c.l.b16 %v782
        %v815 = vunpack.c.l.b16 %v783
        %v816 = vpack.c.b16 %v801, %v800
        %v817 = vpack.c.b16 %v803, %v802
        %v818 = vpack.c.b16 %v805, %v804
        %v819 = vpack.c.b16 %v807, %v806
        %v820 = vpack.c.b16 %v809, %v808
        %v821 = vpack.c.b16 %v811, %v810
        %v822 = vpack.c.b16 %v813, %v812
        %v823 = vpack.c.b16 %v815, %v814
        %832 = vmatprep.subr.bf16.mxu0 0
        %833 = vmatpush1.bf16.msra.mxu0 %v816
        %834 = vmatprep.subr.bf16.mxu0 0
        %835 = vmatpush1.bf16.msra.mxu0 %v817
        %836 = vmatprep.subr.bf16.mxu0 0
        %837 = vmatpush1.bf16.msra.mxu0 %v818
        %838 = vmatprep.subr.bf16.mxu0 0
        %839 = vmatpush1.bf16.msra.mxu0 %v819
        %840 = vmatprep.subr.bf16.mxu0 0
        %841 = vmatpush1.bf16.msra.mxu0 %v820
        %842 = vmatprep.subr.bf16.mxu0 0
        %843 = vmatpush1.bf16.msra.mxu0 %v821
        %844 = vmatprep.subr.bf16.mxu0 0
        %845 = vmatpush1.bf16.msra.mxu0 %v822
        %846 = vmatprep.subr.bf16.mxu0 0
        %847 = vmatpush1.bf16.msra.mxu0 %v823
        %848 = vmatprep.subr.bf16.mxu0 0
        %849 = vmatpush1.bf16.msra.mxu0 0
        %850 = vmatprep.subr.bf16.mxu0 0
        %851 = vmatpush1.bf16.msra.mxu0 0
        %852 = vmatprep.subr.bf16.mxu0 0
        %853 = vmatpush1.bf16.msra.mxu0 0
        %854 = vmatprep.subr.bf16.mxu0 0
        %855 = vmatpush1.bf16.msra.mxu0 0
        %856 = vmatprep.subr.bf16.mxu0 0
        %857 = vmatpush1.bf16.msra.mxu0 0
        %858 = vmatprep.subr.bf16.mxu0 0
        %859 = vmatpush1.bf16.msra.mxu0 0
        %860 = vmatprep.subr.bf16.mxu0 0
        %861 = vmatpush1.bf16.msra.mxu0 0
        %862 = vmatprep.subr.bf16.mxu0 0
        %863 = vmatpush1.bf16.msra.mxu0 0
        %864 = vmatprep.mubr.bf16.mxu0 0
        %865 = vmatmul.mubr.bf16.gmra.mrb[0].mxu0 %v765
        %v866 = vpop.f32.mrb[0].mxu0
        %v867 = vadd.f32 0.0, %v866
        %v868 = vpop.f32.mrb[0].mxu0
        %v869 = vpop.f32.mrb[0].mxu0
        %v870 = vadd.f32 0.0, %v869
        %v871 = vpop.f32.mrb[0].mxu0
        %872 = vdwg.mxu0
        %v874 = vlaneseq
        %v875 = vshrl.u32 %v874, 7
        %v876 = vsub.s32 0, %v875
        %v877 = vrot.slane %v767, %v876
        %v879 = vadd.f32 %v877, %v867
        %v880 = vadd.f32 %v877, %v870
        %s881 = scalar_lea.vmem [#allocation7], 64
        %v882 = vld [vmem:[%s881] sm:$0xf]
        %v883 = vld [vmem:[%s881 + $0x4] sm:$0xf]
        %v884 = vld [vmem:[%s881 + $0x8] sm:$0xf]
        %v885 = vld [vmem:[%s881 + $0xc] sm:$0xf]
        %v886 = vld [vmem:[%s881 + $0x10] sm:$0xf]
        %v887 = vld [vmem:[%s881 + $0x14] sm:$0xf]
        %v888 = vld [vmem:[%s881 + $0x18] sm:$0xf]
        %v889 = vld [vmem:[%s881 + $0x1c] sm:$0xf]
        %v890 = vld [vmem:[%s881 + $0x20] sm:$0xf]
        %v891 = vld [vmem:[%s881 + $0x24] sm:$0xf]
        %v892 = vld [vmem:[%s881 + $0x28] sm:$0xf]
        %v893 = vld [vmem:[%s881 + $0x2c] sm:$0xf]
        %v894 = vld [vmem:[%s881 + $0x30] sm:$0xf]
        %v895 = vld [vmem:[%s881 + $0x34] sm:$0xf]
        %v896 = vld [vmem:[%s881 + $0x38] sm:$0xf]
        %v897 = vld [vmem:[%s881 + $0x3c] sm:$0xf]
        %v900 = vrot.slane %v765, 1
        %v901 = vrot.slane %v766, 1
        %v902 = vsel %vm513, %v900, %v901
        %v920 = vunpack.c.l.b16 %v882
        %v921 = vunpack.c.l.b16 %v883
        %v922 = vunpack.c.l.b16 %v884
        %v923 = vunpack.c.l.b16 %v885
        %v924 = vunpack.c.l.b16 %v886
        %v925 = vunpack.c.l.b16 %v887
        %v926 = vunpack.c.l.b16 %v888
        %v927 = vunpack.c.l.b16 %v889
        %v928 = vunpack.c.l.b16 %v890
        %v929 = vunpack.c.l.b16 %v891
        %v930 = vunpack.c.l.b16 %v892
        %v931 = vunpack.c.l.b16 %v893
        %v932 = vunpack.c.l.b16 %v894
        %v933 = vunpack.c.l.b16 %v895
        %v934 = vunpack.c.l.b16 %v896
        %v935 = vunpack.c.l.b16 %v897
        %v936 = vpack.c.b16 %v921, %v920
        %v937 = vpack.c.b16 %v923, %v922
        %v938 = vpack.c.b16 %v925, %v924
        %v939 = vpack.c.b16 %v927, %v926
        %v940 = vpack.c.b16 %v929, %v928
        %v941 = vpack.c.b16 %v931, %v930
        %v942 = vpack.c.b16 %v933, %v932
        %v943 = vpack.c.b16 %v935, %v934
        %952 = vmatprep.subr.bf16.mxu0 0
        %953 = vmatpush1.bf16.msra.mxu0 %v936
        %954 = vmatprep.subr.bf16.mxu0 0
        %955 = vmatpush1.bf16.msra.mxu0 %v937
        %956 = vmatprep.subr.bf16.mxu0 0
        %957 = vmatpush1.bf16.msra.mxu0 %v938
        %958 = vmatprep.subr.bf16.mxu0 0
        %959 = vmatpush1.bf16.msra.mxu0 %v939
        %960 = vmatprep.subr.bf16.mxu0 0
        %961 = vmatpush1.bf16.msra.mxu0 %v940
        %962 = vmatprep.subr.bf16.mxu0 0
        %963 = vmatpush1.bf16.msra.mxu0 %v941
        %964 = vmatprep.subr.bf16.mxu0 0
        %965 = vmatpush1.bf16.msra.mxu0 %v942
        %966 = vmatprep.subr.bf16.mxu0 0
        %967 = vmatpush1.bf16.msra.mxu0 %v943
        %968 = vmatprep.subr.bf16.mxu0 0
        %969 = vmatpush1.bf16.msra.mxu0 0
        %970 = vmatprep.subr.bf16.mxu0 0
        %971 = vmatpush1.bf16.msra.mxu0 0
        %972 = vmatprep.subr.bf16.mxu0 0
        %973 = vmatpush1.bf16.msra.mxu0 0
        %974 = vmatprep.subr.bf16.mxu0 0
        %975 = vmatpush1.bf16.msra.mxu0 0
        %976 = vmatprep.subr.bf16.mxu0 0
        %977 = vmatpush1.bf16.msra.mxu0 0
        %978 = vmatprep.subr.bf16.mxu0 0
        %979 = vmatpush1.bf16.msra.mxu0 0
        %980 = vmatprep.subr.bf16.mxu0 0
        %981 = vmatpush1.bf16.msra.mxu0 0
        %982 = vmatprep.subr.bf16.mxu0 0
        %983 = vmatpush1.bf16.msra.mxu0 0
        %984 = vmatprep.mubr.bf16.mxu0 0
        %985 = vmatmul.mubr.bf16.gmra.mrb[0].mxu0 %v902
        %v986 = vpop.f32.mrb[0].mxu0
        %v987 = vadd.f32 0.0, %v986
        %v988 = vpop.f32.mrb[0].mxu0
        %v989 = vpop.f32.mrb[0].mxu0
        %v990 = vadd.f32 0.0, %v989
        %v991 = vpop.f32.mrb[0].mxu0
        %992 = vdwg.mxu0
        %v993 = vadd.f32 %v879, %v987
        %v994 = vadd.f32 %v880, %v990
        %s995 = scalar_lea.vmem [#allocation7], 128
        %v996 = vld [vmem:[%s995] sm:$0xf]
        %v997 = vld [vmem:[%s995 + $0x4] sm:$0xf]
        %v998 = vld [vmem:[%s995 + $0x8] sm:$0xf]
        %v999 = vld [vmem:[%s995 + $0xc] sm:$0xf]
        %v1000 = vld [vmem:[%s995 + $0x10] sm:$0xf]
        %v1001 = vld [vmem:[%s995 + $0x14] sm:$0xf]
        %v1002 = vld [vmem:[%s995 + $0x18] sm:$0xf]
        %v1003 = vld [vmem:[%s995 + $0x1c] sm:$0xf]
        %v1004 = vld [vmem:[%s995 + $0x20] sm:$0xf]
        %v1005 = vld [vmem:[%s995 + $0x24] sm:$0xf]
        %v1006 = vld [vmem:[%s995 + $0x28] sm:$0xf]
        %v1007 = vld [vmem:[%s995 + $0x2c] sm:$0xf]
        %v1008 = vld [vmem:[%s995 + $0x30] sm:$0xf]
        %v1009 = vld [vmem:[%s995 + $0x34] sm:$0xf]
        %v1010 = vld [vmem:[%s995 + $0x38] sm:$0xf]
        %v1011 = vld [vmem:[%s995 + $0x3c] sm:$0xf]
        %v1012 = vrot.slane %v765, 2
        %v1013 = vrot.slane %v766, 2
        %v1014 = vsel %vm635, %v1012, %v1013
        %v1032 = vunpack.c.l.b16 %v996
        %v1033 = vunpack.c.l.b16 %v997
        %v1034 = vunpack.c.l.b16 %v998
        %v1035 = vunpack.c.l.b16 %v999
        %v1036 = vunpack.c.l.b16 %v1000
        %v1037 = vunpack.c.l.b16 %v1001
        %v1038 = vunpack.c.l.b16 %v1002
        %v1039 = vunpack.c.l.b16 %v1003
        %v1040 = vunpack.c.l.b16 %v1004
        %v1041 = vunpack.c.l.b16 %v1005
        %v1042 = vunpack.c.l.b16 %v1006
        %v1043 = vunpack.c.l.b16 %v1007
        %v1044 = vunpack.c.l.b16 %v1008
        %v1045 = vunpack.c.l.b16 %v1009
        %v1046 = vunpack.c.l.b16 %v1010
        %v1047 = vunpack.c.l.b16 %v1011
        %v1048 = vpack.c.b16 %v1033, %v1032
        %v1049 = vpack.c.b16 %v1035, %v1034
        %v1050 = vpack.c.b16 %v1037, %v1036
        %v1051 = vpack.c.b16 %v1039, %v1038
        %v1052 = vpack.c.b16 %v1041, %v1040
        %v1053 = vpack.c.b16 %v1043, %v1042
        %v1054 = vpack.c.b16 %v1045, %v1044
        %v1055 = vpack.c.b16 %v1047, %v1046
        %1064 = vmatprep.subr.bf16.mxu0 0
        %1065 = vmatpush1.bf16.msra.mxu0 %v1048
        %1066 = vmatprep.subr.bf16.mxu0 0
        %1067 = vmatpush1.bf16.msra.mxu0 %v1049
        %1068 = vmatprep.subr.bf16.mxu0 0
        %1069 = vmatpush1.bf16.msra.mxu0 %v1050
        %1070 = vmatprep.subr.bf16.mxu0 0
        %1071 = vmatpush1.bf16.msra.mxu0 %v1051
        %1072 = vmatprep.subr.bf16.mxu0 0
        %1073 = vmatpush1.bf16.msra.mxu0 %v1052
        %1074 = vmatprep.subr.bf16.mxu0 0
        %1075 = vmatpush1.bf16.msra.mxu0 %v1053
        %1076 = vmatprep.subr.bf16.mxu0 0
        %1077 = vmatpush1.bf16.msra.mxu0 %v1054
        %1078 = vmatprep.subr.bf16.mxu0 0
        %1079 = vmatpush1.bf16.msra.mxu0 %v1055
        %1080 = vmatprep.subr.bf16.mxu0 0
        %1081 = vmatpush1.bf16.msra.mxu0 0
        %1082 = vmatprep.subr.bf16.mxu0 0
        %1083 = vmatpush1.bf16.msra.mxu0 0
        %1084 = vmatprep.subr.bf16.mxu0 0
        %1085 = vmatpush1.bf16.msra.mxu0 0
        %1086 = vmatprep.subr.bf16.mxu0 0
        %1087 = vmatpush1.bf16.msra.mxu0 0
        %1088 = vmatprep.subr.bf16.mxu0 0
        %1089 = vmatpush1.bf16.msra.mxu0 0
        %1090 = vmatprep.subr.bf16.mxu0 0
        %1091 = vmatpush1.bf16.msra.mxu0 0
        %1092 = vmatprep.subr.bf16.mxu0 0
        %1093 = vmatpush1.bf16.msra.mxu0 0
        %1094 = vmatprep.subr.bf16.mxu0 0
        %1095 = vmatpush1.bf16.msra.mxu0 0
        %1096 = vmatprep.mubr.bf16.mxu0 0
        %1097 = vmatmul.mubr.bf16.gmra.mrb[0].mxu0 %v1014
        %v1098 = vpop.f32.mrb[0].mxu0
        %v1099 = vadd.f32 0.0, %v1098
        %v1100 = vpop.f32.mrb[0].mxu0
        %v1101 = vpop.f32.mrb[0].mxu0
        %v1102 = vadd.f32 0.0, %v1101
        %v1103 = vpop.f32.mrb[0].mxu0
        %1104 = vdwg.mxu0
        %v1105 = vadd.f32 %v993, %v1099
        %v1106 = vadd.f32 %v994, %v1102
        %v1107 = vmax.f32 %v1105, 0.0
        %v1108 = vmax.f32 %v1106, 0.0
        %v1109 = vld [vmem:[#allocation8] sm:$0xf]
        %v1110 = vld [vmem:[#allocation8 + $0x4] sm:$0xf]
        %v1111 = vld [vmem:[#allocation8 + $0x8] sm:$0xf]
        %v1112 = vld [vmem:[#allocation8 + $0xc] sm:$0xf]
        %v1113 = vld [vmem:[#allocation8 + $0x10] sm:$0xf]
        %v1114 = vld [vmem:[#allocation8 + $0x14] sm:$0xf]
        %v1115 = vld [vmem:[#allocation8 + $0x18] sm:$0xf]
        %v1116 = vld [vmem:[#allocation8 + $0x1c] sm:$0xf]
        %v1117 = vld [vmem:[#allocation8 + $0x20] sm:$0xf]
        %v1118 = vld [vmem:[#allocation8 + $0x24] sm:$0xf]
        %v1119 = vld [vmem:[#allocation8 + $0x28] sm:$0xf]
        %v1120 = vld [vmem:[#allocation8 + $0x2c] sm:$0xf]
        %v1121 = vld [vmem:[#allocation8 + $0x30] sm:$0xf]
        %v1122 = vld [vmem:[#allocation8 + $0x34] sm:$0xf]
        %v1123 = vld [vmem:[#allocation8 + $0x38] sm:$0xf]
        %v1124 = vld [vmem:[#allocation8 + $0x3c] sm:$0xf]
        %v1125 = vld [vmem:[%s6] sm:$0x1]
        %v1127 = vlaneseq
        %v1128 = vshrl.u32 %v1127, 7
        %v1129 = vsub.s32 0, %v1128
        %v1130 = vrot.slane %v1125, %v1129
        %v1148 = vunpack.c.l.b16 %v1109
        %v1149 = vunpack.c.l.b16 %v1110
        %v1150 = vunpack.c.l.b16 %v1111
        %v1151 = vunpack.c.l.b16 %v1112
        %v1152 = vunpack.c.l.b16 %v1113
        %v1153 = vunpack.c.l.b16 %v1114
        %v1154 = vunpack.c.l.b16 %v1115
        %v1155 = vunpack.c.l.b16 %v1116
        %v1156 = vunpack.c.l.b16 %v1117
        %v1157 = vunpack.c.l.b16 %v1118
        %v1158 = vunpack.c.l.b16 %v1119
        %v1159 = vunpack.c.l.b16 %v1120
        %v1160 = vunpack.c.l.b16 %v1121
        %v1161 = vunpack.c.l.b16 %v1122
        %v1162 = vunpack.c.l.b16 %v1123
        %v1163 = vunpack.c.l.b16 %v1124
        %v1164 = vpack.c.b16 %v1149, %v1148
        %v1165 = vpack.c.b16 %v1151, %v1150
        %v1166 = vpack.c.b16 %v1153, %v1152
        %v1167 = vpack.c.b16 %v1155, %v1154
        %v1168 = vpack.c.b16 %v1157, %v1156
        %v1169 = vpack.c.b16 %v1159, %v1158
        %v1170 = vpack.c.b16 %v1161, %v1160
        %v1171 = vpack.c.b16 %v1163, %v1162
        %1180 = vmatprep.subr.bf16.mxu0 0
        %1181 = vmatpush1.bf16.msra.mxu0 %v1164
        %1182 = vmatprep.subr.bf16.mxu0 0
        %1183 = vmatpush1.bf16.msra.mxu0 %v1165
        %1184 = vmatprep.subr.bf16.mxu0 0
        %1185 = vmatpush1.bf16.msra.mxu0 %v1166
        %1186 = vmatprep.subr.bf16.mxu0 0
        %1187 = vmatpush1.bf16.msra.mxu0 %v1167
        %1188 = vmatprep.subr.bf16.mxu0 0
        %1189 = vmatpush1.bf16.msra.mxu0 %v1168
        %1190 = vmatprep.subr.bf16.mxu0 0
        %1191 = vmatpush1.bf16.msra.mxu0 %v1169
        %1192 = vmatprep.subr.bf16.mxu0 0
        %1193 = vmatpush1.bf16.msra.mxu0 %v1170
        %1194 = vmatprep.subr.bf16.mxu0 0
        %1195 = vmatpush1.bf16.msra.mxu0 %v1171
        %1196 = vmatprep.subr.bf16.mxu0 0
        %1197 = vmatpush1.bf16.msra.mxu0 0
        %1198 = vmatprep.subr.bf16.mxu0 0
        %1199 = vmatpush1.bf16.msra.mxu0 0
        %1200 = vmatprep.subr.bf16.mxu0 0
        %1201 = vmatpush1.bf16.msra.mxu0 0
        %1202 = vmatprep.subr.bf16.mxu0 0
        %1203 = vmatpush1.bf16.msra.mxu0 0
        %1204 = vmatprep.subr.bf16.mxu0 0
        %1205 = vmatpush1.bf16.msra.mxu0 0
        %1206 = vmatprep.subr.bf16.mxu0 0
        %1207 = vmatpush1.bf16.msra.mxu0 0
        %1208 = vmatprep.subr.bf16.mxu0 0
        %1209 = vmatpush1.bf16.msra.mxu0 0
        %1210 = vmatprep.subr.bf16.mxu0 0
        %1211 = vmatpush1.bf16.msra.mxu0 0
        %1212 = vmatprep.mubr.bf16.mxu0 0
        %1213 = vmatmul.mubr.bf16.gmra.mrb[0].mxu0 %v364
        %v1214 = vpop.f32.mrb[0].mxu0
        %v1215 = vadd.f32 %v1130, %v1214
        %v1216 = vpop.f32.mrb[0].mxu0
        %v1217 = vpop.f32.mrb[0].mxu0
        %v1218 = vadd.f32 %v1130, %v1217
        %v1219 = vpop.f32.mrb[0].mxu0
        %1220 = vdwg.mxu0
        %v1221 = vadd.f32 %v1107, %v1215
        %v1222 = vadd.f32 %v1108, %v1218
        %v1223 = vmax.f32 %v1221, 0.0
        %v1224 = vmax.f32 %v1222, 0.0
        %1225 = vst [vmem:[%s358] sm:$0xff] %v1223
        %1226 = vst [vmem:[%s358 + $0x8] sm:$0xff] %v1224
        %s1227 = sand.u32 %s202, 1
        %s1228 = scalar_lea.sflag [#allocation4], %s1227
        %s1229 = sand.u32 %s202, 1
        %s1230 = smul.addr %s1229, 16
        %s1231 = scalar_lea.vmem [#allocation10], %s1230
        // Predicated region
        $region65: #{tpu_custom_call.1} parent=47 // pred_check
          %p1232 = pneg %p212
        $region66: #{tpu_custom_call.1} parent=47 // pred_check_branch
          %1234 = sbr.rel (%p1232) target = $region68
        $region67: #{tpu_custom_call.1} parent=47 // pred_region
          %s1235 = smul.u32 2, %s31
          %s1237 = ssub.s32 256, 256
          %1238 = vsyncadd %s1228, %s1237
          %s1239 = smul.addr %s30, 2
          %s1240 = sadd.s32 %s1235, %s1239
          %s1241 = smul.addr %s1240, 128
          %s1242 = scalar_lea.hbm %s7, %s1241
          %s1243 = sshll.u32 %s1231, 4
          %s1244 = int_to_ptr.vmem [resolvable:$true] %s1243
          %1249 = dma.vmem_to_hbm [thread:$0]  %s1244, 256, %s1242, %s1228, 128, 128, 8
        $region68: #{tpu_custom_call.1} parent=47 // pred_fallthru
          _
      $region48: #{tpu_custom_call.1} parent=5 // pred_fallthru
        _
      %p1250 = scmp.le.s32.totalorder 2, %s21
      // Predicated region
      $region69: #{tpu_custom_call.1} parent=5 // pred_check
        %p1251 = pneg %p1250
      $region70: #{tpu_custom_call.1} parent=5 // pred_check_branch
        %1253 = sbr.rel (%p1251) target = $region72
      $region71: #{tpu_custom_call.1} parent=5 // pred_region
        %s1254 = ssub.s32 %s21, 2
        // Predicated region
        $region73: #{tpu_custom_call.1} parent=71 // pred_check
          %p1255 = pneg %p218
        $region74: #{tpu_custom_call.1} parent=71 // pred_check_branch
          %1257 = sbr.rel (%p1255) target = $region76
        $region75: #{tpu_custom_call.1} parent=71 // pred_region
          %s1258 = sand.u32 %s203, 1
          %s1259 = scalar_lea.sflag [#allocation4], %s1258
          %s1260 = sand.u32 %s203, 1
          %s1261 = smul.addr %s1260, 16
          %s1262 = scalar_lea.vmem [#allocation10], %s1261
          %1263 = dma.done %s1259, 256
        $region76: #{tpu_custom_call.1} parent=71 // pred_fallthru
          _
      $region72: #{tpu_custom_call.1} parent=5 // pred_fallthru
        _
    $region6: #{tpu_custom_call.1} parent=1 // loop_footer
      %s25 = sadd.s32 1, %s21
    $region7: #{tpu_custom_call.1} parent=1 // loop_footer_branch
      %20 = sbr.rel target = $region3
    $region8: #{tpu_custom_call.1} parent=1 // loop_exit
      _
    %1264 = vsyncpa [#allocation3], 1
    %s1265 = scalar_lea.sflag [#allocation3], 1
    %1266 = vsyncpa %s1265, 1
    %1267 = vsyncpa [#allocation6], 1
    %1268 = vsyncpa [#allocation9], 1
    %1269 = vsyncpa [#allocation4], 1
    %s1270 = scalar_lea.sflag [#allocation4], 1
    %1271 = vsyncpa %s1270, 1

</llo_original>
